<compile_context>
chip_gen: v7x
topology: tpu7x:2x2x1
jax: 0.10.0
libtpu: 0.0.40
codegen_flags: <defaults>
</compile_context>

<pallas_src>
import functools

import jax
import jax.numpy as jnp
from jax.experimental import pallas as pl
from jax.experimental.pallas import tpu as pltpu


# ---------------------------------------------------------------------------
# Fused whole-block kernel
# ---------------------------------------------------------------------------
def _resnet_block_kernel(*refs, stride, residual_mode, h, w, ho, wo,
                         c_in, c_out):
    if residual_mode == "pool_conv":        # stride == 2: AvgPool(2,2) + 1x1 conv
        (x_ref, wa_ref, sha_ref, wb_ref, shb_ref, wd_ref,
         o_ref, rxa, rpa) = refs
        shd_ref = None
    elif residual_mode == "conv_bn":        # c_in != c_out: ReLU + 1x1 conv + BN
        (x_ref, wa_ref, sha_ref, wb_ref, shb_ref, wd_ref, shd_ref,
         o_ref, rxa, rpa) = refs
    else:                                   # identity
        (x_ref, wa_ref, sha_ref, wb_ref, shb_ref,
         o_ref, rxa, rpa) = refs
        wd_ref = shd_ref = None

    cdt = x_ref.dtype                       # compute dtype (bf16-ready)

    def sl(start, size, step):
        return pl.ds(start, size) if step == 1 else pl.ds(start, size, step)

    def conv3x3(src_ref, step, oh, ow, w_mat_ref, shift_ref):
        # Build the 9 shifted taps directly from VMEM (no HBM replication) and
        # contract them in a single MXU matmul with f32 accumulation.
        taps = [src_ref[sl(di, oh, step), sl(dj, ow, step), :]
                for di in range(3) for dj in range(3)]
        patches = jnp.concatenate(taps, axis=-1)              # (oh, ow, 9*C)
        patches = patches.reshape(oh * ow, patches.shape[-1])  # (M, 9*C)
        acc = jnp.dot(patches, w_mat_ref[...],
                      preferred_element_type=jnp.float32)      # (M, Cout) f32
        return acc + shift_ref[...]                            # folded BN shift

    # Stage 0: ReLU(x) into a zero-padded VMEM scratch (ReLU applied exactly
    # once per input element; zero padding commutes with ReLU).
    rxa[...] = jnp.zeros_like(rxa)
    rxa[pl.ds(1, h), pl.ds(1, w), :] = jnp.maximum(x_ref[...], 0)

    # conv_a: ReLU -> 3x3 conv (stride) -> BN (scale folded into the weight).
    a = conv3x3(rxa, stride, ho, wo, wa_ref, sha_ref)          # (ho*wo, Cout) f32

    # ReLU(a) into a zero-padded scratch that feeds conv_b.
    rpa[...] = jnp.zeros_like(rpa)
    rpa[pl.ds(1, ho), pl.ds(1, wo), :] = (
        jnp.maximum(a, 0.0).astype(cdt).reshape(ho, wo, c_out))

    # conv_b: ReLU -> 3x3 conv (stride 1) -> BN.
    b = conv3x3(rpa, 1, ho, wo, wb_ref, shb_ref)               # (ho*wo, Cout) f32

    # Residual path.
    if residual_mode == "pool_conv":
        # AvgPool2d(2,2) + 1x1 conv (no ReLU/BN); the 0.25 factor is folded
        # into wd in the wrapper, so only the 4-way sum happens here.
        pooled = (x_ref[sl(0, ho, 2), sl(0, wo, 2), :]
                  + x_ref[sl(0, ho, 2), sl(1, wo, 2), :]
                  + x_ref[sl(1, ho, 2), sl(0, wo, 2), :]
                  + x_ref[sl(1, ho, 2), sl(1, wo, 2), :])       # (ho, wo, Cin)
        resid = jnp.dot(pooled.reshape(ho * wo, c_in), wd_ref[...],
                        preferred_element_type=jnp.float32)
    elif residual_mode == "conv_bn":
        rx = rxa[pl.ds(1, h), pl.ds(1, w), :]                   # ReLU(x), unpadded
        resid = jnp.dot(rx.reshape(h * w, c_in), wd_ref[...],
                        preferred_element_type=jnp.float32) + shd_ref[...]
    else:
        resid = x_ref[...].reshape(h * w, c_out).astype(jnp.float32)

    o_ref[...] = (b + resid).astype(o_ref.dtype)


# ---------------------------------------------------------------------------
# Parameters + BN folding
# ---------------------------------------------------------------------------
def _bn_init(key, c):
    k1, k2, k3, k4 = jax.random.split(key, 4)
    return dict(
        gamma=jax.random.uniform(k1, (c,), minval=0.5, maxval=1.5),
        beta=jax.random.normal(k2, (c,)) * 0.1,
        mean=jax.random.normal(k3, (c,)) * 0.1,
        var=jax.random.uniform(k4, (c,), minval=0.5, maxval=1.5),
    )


def _bn_fold(bn, eps=1e-5):
    scale = bn['gamma'] / jnp.sqrt(bn['var'] + eps)
    shift = bn['beta'] - bn['mean'] * scale
    return scale, shift


def init_block_params(key, c_in, c_out, stride):
    ks = jax.random.split(key, 6)
    params = {
        'wa': jax.random.normal(ks[0], (3, 3, c_in, c_out)) * 0.1,   # HWIO
        'bna': _bn_init(ks[1], c_out),
        'wb': jax.random.normal(ks[2], (3, 3, c_out, c_out)) * 0.1,  # HWIO
        'bnb': _bn_init(ks[3], c_out),
    }
    if stride == 2:
        params['w_down'] = jax.random.normal(ks[4], (1, 1, c_in, c_out)) * 0.1
    elif c_in != c_out:
        params['w_down'] = jax.random.normal(ks[4], (1, 1, c_in, c_out)) * 0.1
        params['bnd'] = _bn_init(ks[5], c_out)
    return params


# ---------------------------------------------------------------------------
# Wrapper: weight folding (one-time) + single fused pallas_call
# ---------------------------------------------------------------------------
@functools.partial(jax.jit, static_argnums=(2, 3, 4))
def resnet_basic_block(x_nchw, params, c_in, c_out, stride):
    assert stride in (1, 2)
    N, C, H, W = x_nchw.shape
    assert C == c_in
    Ho = (H + 2 - 3) // stride + 1
    Wo = (W + 2 - 3) // stride + 1

    x = jnp.transpose(x_nchw, (0, 2, 3, 1))          # NCHW -> NHWC (layout only)
    dt = x.dtype
    itemsize = jnp.dtype(dt).itemsize

    # Fold BN scale into the conv weights once, outside the hot loop.
    sa, ba = _bn_fold(params['bna'])
    sb, bb = _bn_fold(params['bnb'])
    wa_mat = (params['wa'].reshape(9 * c_in, c_out) * sa[None, :]).astype(dt)
    wb_mat = (params['wb'].reshape(9 * c_out, c_out) * sb[None, :]).astype(dt)
    shift_a = ba.reshape(1, c_out).astype(jnp.float32)
    shift_b = bb.reshape(1, c_out).astype(jnp.float32)

    args = [x, wa_mat, shift_a, wb_mat, shift_b]
    in_specs = [
        pl.BlockSpec((None, H, W, c_in), lambda i: (i, 0, 0, 0)),
        pl.BlockSpec((9 * c_in, c_out), lambda i: (0, 0)),
        pl.BlockSpec((1, c_out), lambda i: (0, 0)),
        pl.BlockSpec((9 * c_out, c_out), lambda i: (0, 0)),
        pl.BlockSpec((1, c_out), lambda i: (0, 0)),
    ]

    if stride == 2:
        residual_mode = "pool_conv"
        wd_mat = (0.25 * params['w_down'].reshape(c_in, c_out)).astype(dt)
        args.append(wd_mat)
        in_specs.append(pl.BlockSpec((c_in, c_out), lambda i: (0, 0)))
    elif c_in != c_out:
        residual_mode = "conv_bn"
        sd, bd = _bn_fold(params['bnd'])
        wd_mat = (params['w_down'].reshape(c_in, c_out) * sd[None, :]).astype(dt)
        shift_d = bd.reshape(1, c_out).astype(jnp.float32)
        args += [wd_mat, shift_d]
        in_specs += [pl.BlockSpec((c_in, c_out), lambda i: (0, 0)),
                     pl.BlockSpec((1, c_out), lambda i: (0, 0))]
    else:
        residual_mode = "identity"

    kernel = functools.partial(
        _resnet_block_kernel, stride=stride, residual_mode=residual_mode,
        h=H, w=W, ho=Ho, wo=Wo, c_in=c_in, c_out=c_out)

    flops = int(2 * N * Ho * Wo * (9 * c_in * c_out + 9 * c_out * c_out
                                   + c_in * c_out))
    bytes_accessed = int((x.size + wa_mat.size + wb_mat.size) * itemsize
                         + N * Ho * Wo * c_out * itemsize)

    out = pl.pallas_call(
        kernel,
        out_shape=jax.ShapeDtypeStruct((N, Ho * Wo, c_out), dt),
        grid=(N,),
        in_specs=in_specs,
        out_specs=pl.BlockSpec((None, Ho * Wo, c_out), lambda i: (i, 0, 0)),
        scratch_shapes=[
            pltpu.VMEM((H + 2, W + 2, c_in), dt),     # ReLU(x), zero-padded
            pltpu.VMEM((Ho + 2, Wo + 2, c_out), dt),  # ReLU(conv_a), zero-padded
        ],
        compiler_params=pltpu.CompilerParams(
            dimension_semantics=("parallel",)),
        cost_estimate=pl.CostEstimate(flops=flops, transcendentals=0,
                                      bytes_accessed=bytes_accessed),
    )(*args)

    # Layout plumbing back to NCHW.
    return jnp.transpose(out.reshape(N, Ho, Wo, c_out), (0, 3, 1, 2))


# ---------------------------------------------------------------------------
# Pure-JAX reference (for correctness check)
# ---------------------------------------------------------------------------
def ref_block(x_nchw, params, c_in, c_out, stride, eps=1e-5):
    x = jnp.transpose(x_nchw, (0, 2, 3, 1))

    def rcb(y, w, bn, s, pad):
        y = jnp.maximum(y, 0.0)
        y = jax.lax.conv_general_dilated(
            y, w, (s, s), [(pad, pad), (pad, pad)],
            dimension_numbers=('NHWC', 'HWIO', 'NHWC'))
        scale = bn['gamma'] / jnp.sqrt(bn['var'] + eps)
        shift = bn['beta'] - bn['mean'] * scale
        return y * scale + shift

    a = rcb(x, params['wa'], params['bna'], stride, 1)
    b = rcb(a, params['wb'], params['bnb'], 1, 1)

    if stride == 2:
        N, H, W, C = x.shape
        pooled = x.reshape(N, H // 2, 2, W // 2, 2, C).mean(axis=(2, 4))
        res = jax.lax.conv_general_dilated(
            pooled, params['w_down'], (1, 1), [(0, 0), (0, 0)],
            dimension_numbers=('NHWC', 'HWIO', 'NHWC'))
    elif c_in != c_out:
        res = rcb(x, params['w_down'], params['bnd'], 1, 0)
    else:
        res = x
    return jnp.transpose(res + b, (0, 3, 1, 2))


if __name__ == "__main__":
    key = jax.random.PRNGKey(0)
    kx, kp1, kp2, kp3 = jax.random.split(key, 4)

    # Block 1: c_in=4 -> c_out=8, stride=2 (AvgPool + 1x1 conv downsample path)
    x = jax.random.normal(kx, (2, 4, 16, 16), jnp.float32)
    p1 = init_block_params(kp1, 4, 8, 2)
    out1 = resnet_basic_block(x, p1, 4, 8, 2)
    jax.block_until_ready(out1)
    ref1 = ref_block(x, p1, 4, 8, 2)
    assert out1.shape == (2, 8, 8, 8)
    err1 = float(jnp.max(jnp.abs(out1 - ref1)))
    assert err1 < 1e-3, f"block1 mismatch: {err1}"

    # Block 2: c_in=8 -> c_out=8, stride=1 (identity residual path)
    p2 = init_block_params(kp2, 8, 8, 1)
    out2 = resnet_basic_block(out1, p2, 8, 8, 1)
    jax.block_until_ready(out2)
    ref2 = ref_block(out1, p2, 8, 8, 1)
    assert out2.shape == (2, 8, 8, 8)
    err2 = float(jnp.max(jnp.abs(out2 - ref2)))
    assert err2 < 1e-3, f"block2 mismatch: {err2}"

    # Block 3: c_in=4 -> c_out=8, stride=1 (ReLU-conv-BN downsample path)
    p3 = init_block_params(kp3, 4, 8, 1)
    out3 = resnet_basic_block(x, p3, 4, 8, 1)
    jax.block_until_ready(out3)
    ref3 = ref_block(x, p3, 4, 8, 1)
    assert out3.shape == (2, 8, 16, 16)
    err3 = float(jnp.max(jnp.abs(out3 - ref3)))
    assert err3 < 1e-3, f"block3 mismatch: {err3}"

    print("KERNEL_OK")
</pallas_src>

<mosaic_0001>
module attributes {stable_mosaic.version = 11 : i64} {
  func.func @_resnet_block_kernel(%arg0: i32, %arg1: memref<1x16x16x4xf32, #tpu.memory_space<vmem>>, %arg2: memref<36x8xf32, #tpu.memory_space<vmem>>, %arg3: memref<1x8xf32, #tpu.memory_space<vmem>>, %arg4: memref<72x8xf32, #tpu.memory_space<vmem>>, %arg5: memref<1x8xf32, #tpu.memory_space<vmem>>, %arg6: memref<4x8xf32, #tpu.memory_space<vmem>>, %arg7: memref<1x64x8xf32, #tpu.memory_space<vmem>>, %arg8: memref<18x18x4xf32, #tpu.memory_space<vmem>>, %arg9: memref<10x10x8xf32, #tpu.memory_space<vmem>>) attributes {dimension_semantics = [#tpu.dimension_semantics<parallel>], iteration_bounds = array<i64: 2>, scalar_prefetch = 0 : i64, scratch_operands = 2 : i64, tpu.core_type = #tpu.core_type<tc>, window_params = [{transform_indices = @transform_0, window_bounds = array<i64: 1, 16, 16, 4>}, {pipeline_mode = #tpu.pipeline_mode<synchronous>, transform_indices = @transform_1, window_bounds = array<i64: 36, 8>}, {pipeline_mode = #tpu.pipeline_mode<synchronous>, transform_indices = @transform_2, window_bounds = array<i64: 1, 8>}, {pipeline_mode = #tpu.pipeline_mode<synchronous>, transform_indices = @transform_3, window_bounds = array<i64: 72, 8>}, {pipeline_mode = #tpu.pipeline_mode<synchronous>, transform_indices = @transform_4, window_bounds = array<i64: 1, 8>}, {pipeline_mode = #tpu.pipeline_mode<synchronous>, transform_indices = @transform_5, window_bounds = array<i64: 4, 8>}, {transform_indices = @transform_6, window_bounds = array<i64: 1, 64, 8>}]} {
    %cst = arith.constant 0.000000e+00 : f32
    %0 = vector.broadcast %cst : f32 to vector<18x18x4xf32>
    %c0 = arith.constant 0 : index
    %c0_0 = arith.constant 0 : index
    %c0_1 = arith.constant 0 : index
    %1 = vector.load %arg8[%c0, %c0_0, %c0_1] : memref<18x18x4xf32, #tpu.memory_space<vmem>>, vector<18x18x4xf32>
    tpu.vector_store %arg8[%c0, %c0_0, %c0_1], %0 {strides = array<i32>} : memref<18x18x4xf32, #tpu.memory_space<vmem>>, vector<18x18x4xf32>,
    %c0_2 = arith.constant 0 : index
    %c0_3 = arith.constant 0 : index
    %c0_4 = arith.constant 0 : index
    %c0_5 = arith.constant 0 : index
    %2 = vector.load %arg1[%c0_2, %c0_3, %c0_4, %c0_5] : memref<1x16x16x4xf32, #tpu.memory_space<vmem>>, vector<1x16x16x4xf32>
    %3 = vector.shape_cast %2 : vector<1x16x16x4xf32> to vector<16x16x4xf32>
    %cst_6 = arith.constant 0.000000e+00 : f32
    %4 = vector.broadcast %cst_6 : f32 to vector<16x16x4xf32>
    %5 = arith.maximumf %3, %4 : vector<16x16x4xf32>
    %c1 = arith.constant 1 : index
    %c1_7 = arith.constant 1 : index
    %c0_8 = arith.constant 0 : index
    %6 = vector.load %arg8[%c1, %c1_7, %c0_8] : memref<18x18x4xf32, #tpu.memory_space<vmem>>, vector<16x16x4xf32>
    tpu.vector_store %arg8[%c1, %c1_7, %c0_8], %5 {strides = array<i32>} : memref<18x18x4xf32, #tpu.memory_space<vmem>>, vector<16x16x4xf32>,
    %c0_9 = arith.constant 0 : index
    %c0_10 = arith.constant 0 : index
    %c0_11 = arith.constant 0 : index
    %7 = tpu.strided_load %arg8[%c0_9, %c0_10, %c0_11] {strides = array<i32: 2, 2, 1>} : memref<18x18x4xf32, #tpu.memory_space<vmem>>, vector<8x8x4xf32>
    %c0_12 = arith.constant 0 : index
    %c1_13 = arith.constant 1 : index
    %c0_14 = arith.constant 0 : index
    %8 = tpu.strided_load %arg8[%c0_12, %c1_13, %c0_14] {strides = array<i32: 2, 2, 1>} : memref<18x18x4xf32, #tpu.memory_space<vmem>>, vector<8x8x4xf32>
    %c0_15 = arith.constant 0 : index
    %c2 = arith.constant 2 : index
    %c0_16 = arith.constant 0 : index
    %9 = tpu.strided_load %arg8[%c0_15, %c2, %c0_16] {strides = array<i32: 2, 2, 1>} : memref<18x18x4xf32, #tpu.memory_space<vmem>>, vector<8x8x4xf32>
    %c1_17 = arith.constant 1 : index
    %c0_18 = arith.constant 0 : index
    %c0_19 = arith.constant 0 : index
    %10 = tpu.strided_load %arg8[%c1_17, %c0_18, %c0_19] {strides = array<i32: 2, 2, 1>} : memref<18x18x4xf32, #tpu.memory_space<vmem>>, vector<8x8x4xf32>
    %c1_20 = arith.constant 1 : index
    %c1_21 = arith.constant 1 : index
    %c0_22 = arith.constant 0 : index
    %11 = tpu.strided_load %arg8[%c1_20, %c1_21, %c0_22] {strides = array<i32: 2, 2, 1>} : memref<18x18x4xf32, #tpu.memory_space<vmem>>, vector<8x8x4xf32>
    %c1_23 = arith.constant 1 : index
    %c2_24 = arith.constant 2 : index
    %c0_25 = arith.constant 0 : index
    %12 = tpu.strided_load %arg8[%c1_23, %c2_24, %c0_25] {strides = array<i32: 2, 2, 1>} : memref<18x18x4xf32, #tpu.memory_space<vmem>>, vector<8x8x4xf32>
    %c2_26 = arith.constant 2 : index
    %c0_27 = arith.constant 0 : index
    %c0_28 = arith.constant 0 : index
    %13 = tpu.strided_load %arg8[%c2_26, %c0_27, %c0_28] {strides = array<i32: 2, 2, 1>} : memref<18x18x4xf32, #tpu.memory_space<vmem>>, vector<8x8x4xf32>
    %c2_29 = arith.constant 2 : index
    %c1_30 = arith.constant 1 : index
    %c0_31 = arith.constant 0 : index
    %14 = tpu.strided_load %arg8[%c2_29, %c1_30, %c0_31] {strides = array<i32: 2, 2, 1>} : memref<18x18x4xf32, #tpu.memory_space<vmem>>, vector<8x8x4xf32>
    %c2_32 = arith.constant 2 : index
    %c2_33 = arith.constant 2 : index
    %c0_34 = arith.constant 0 : index
    %15 = tpu.strided_load %arg8[%c2_32, %c2_33, %c0_34] {strides = array<i32: 2, 2, 1>} : memref<18x18x4xf32, #tpu.memory_space<vmem>>, vector<8x8x4xf32>
    %16 = tpu.concatenate %7, %8, %9, %10, %11, %12, %13, %14, %15 in 2 : vector<8x8x4xf32>, vector<8x8x4xf32>, vector<8x8x4xf32>, vector<8x8x4xf32>, vector<8x8x4xf32>, vector<8x8x4xf32>, vector<8x8x4xf32>, vector<8x8x4xf32>, vector<8x8x4xf32> -> vector<8x8x36xf32>
    %17 = vector.shape_cast %16 : vector<8x8x36xf32> to vector<64x36xf32>
    %c0_35 = arith.constant 0 : index
    %c0_36 = arith.constant 0 : index
    %18 = vector.load %arg2[%c0_35, %c0_36] : memref<36x8xf32, #tpu.memory_space<vmem>>, vector<36x8xf32>
    %cst_37 = arith.constant dense<0.000000e+00> : vector<64x8xf32>
    %19 = tpu.matmul %17, %18, %cst_37 {dimension_numbers = #tpu.dot_dimension_numbers<[1], [0], [0], [1], [0, 0, 1, 1], [], []>} : vector<64x36xf32>, vector<36x8xf32>, vector<64x8xf32> -> vector<64x8xf32>
    %c0_38 = arith.constant 0 : index
    %c0_39 = arith.constant 0 : index
    %20 = vector.load %arg3[%c0_38, %c0_39] : memref<1x8xf32, #tpu.memory_space<vmem>>, vector<1x8xf32>
    %21 = vector.broadcast %20 : vector<1x8xf32> to vector<64x8xf32>
    %22 = arith.addf %19, %21 : vector<64x8xf32>
    %cst_40 = arith.constant 0.000000e+00 : f32
    %23 = vector.broadcast %cst_40 : f32 to vector<10x10x8xf32>
    %c0_41 = arith.constant 0 : index
    %c0_42 = arith.constant 0 : index
    %c0_43 = arith.constant 0 : index
    %24 = vector.load %arg9[%c0_41, %c0_42, %c0_43] : memref<10x10x8xf32, #tpu.memory_space<vmem>>, vector<10x10x8xf32>
    tpu.vector_store %arg9[%c0_41, %c0_42, %c0_43], %23 {strides = array<i32>} : memref<10x10x8xf32, #tpu.memory_space<vmem>>, vector<10x10x8xf32>,
    %cst_44 = arith.constant 0.000000e+00 : f32
    %25 = vector.broadcast %cst_44 : f32 to vector<64x8xf32>
    %26 = arith.maximumf %22, %25 : vector<64x8xf32>
    %27 = vector.shape_cast %26 : vector<64x8xf32> to vector<8x8x8xf32>
    %c1_45 = arith.constant 1 : index
    %c1_46 = arith.constant 1 : index
    %c0_47 = arith.constant 0 : index
    %28 = vector.load %arg9[%c1_45, %c1_46, %c0_47] : memref<10x10x8xf32, #tpu.memory_space<vmem>>, vector<8x8x8xf32>
    tpu.vector_store %arg9[%c1_45, %c1_46, %c0_47], %27 {strides = array<i32>} : memref<10x10x8xf32, #tpu.memory_space<vmem>>, vector<8x8x8xf32>,
    %c0_48 = arith.constant 0 : index
    %c0_49 = arith.constant 0 : index
    %c0_50 = arith.constant 0 : index
    %29 = vector.load %arg9[%c0_48, %c0_49, %c0_50] : memref<10x10x8xf32, #tpu.memory_space<vmem>>, vector<8x8x8xf32>
    %c0_51 = arith.constant 0 : index
    %c1_52 = arith.constant 1 : index
    %c0_53 = arith.constant 0 : index
    %30 = vector.load %arg9[%c0_51, %c1_52, %c0_53] : memref<10x10x8xf32, #tpu.memory_space<vmem>>, vector<8x8x8xf32>
    %c0_54 = arith.constant 0 : index
    %c2_55 = arith.constant 2 : index
    %c0_56 = arith.constant 0 : index
    %31 = vector.load %arg9[%c0_54, %c2_55, %c0_56] : memref<10x10x8xf32, #tpu.memory_space<vmem>>, vector<8x8x8xf32>
    %c1_57 = arith.constant 1 : index
    %c0_58 = arith.constant 0 : index
    %c0_59 = arith.constant 0 : index
    %32 = vector.load %arg9[%c1_57, %c0_58, %c0_59] : memref<10x10x8xf32, #tpu.memory_space<vmem>>, vector<8x8x8xf32>
    %c1_60 = arith.constant 1 : index
    %c1_61 = arith.constant 1 : index
    %c0_62 = arith.constant 0 : index
    %33 = vector.load %arg9[%c1_60, %c1_61, %c0_62] : memref<10x10x8xf32, #tpu.memory_space<vmem>>, vector<8x8x8xf32>
    %c1_63 = arith.constant 1 : index
    %c2_64 = arith.constant 2 : index
    %c0_65 = arith.constant 0 : index
    %34 = vector.load %arg9[%c1_63, %c2_64, %c0_65] : memref<10x10x8xf32, #tpu.memory_space<vmem>>, vector<8x8x8xf32>
    %c2_66 = arith.constant 2 : index
    %c0_67 = arith.constant 0 : index
    %c0_68 = arith.constant 0 : index
    %35 = vector.load %arg9[%c2_66, %c0_67, %c0_68] : memref<10x10x8xf32, #tpu.memory_space<vmem>>, vector<8x8x8xf32>
    %c2_69 = arith.constant 2 : index
    %c1_70 = arith.constant 1 : index
    %c0_71 = arith.constant 0 : index
    %36 = vector.load %arg9[%c2_69, %c1_70, %c0_71] : memref<10x10x8xf32, #tpu.memory_space<vmem>>, vector<8x8x8xf32>
    %c2_72 = arith.constant 2 : index
    %c2_73 = arith.constant 2 : index
    %c0_74 = arith.constant 0 : index
    %37 = vector.load %arg9[%c2_72, %c2_73, %c0_74] : memref<10x10x8xf32, #tpu.memory_space<vmem>>, vector<8x8x8xf32>
    %38 = tpu.concatenate %29, %30, %31, %32, %33, %34, %35, %36, %37 in 2 : vector<8x8x8xf32>, vector<8x8x8xf32>, vector<8x8x8xf32>, vector<8x8x8xf32>, vector<8x8x8xf32>, vector<8x8x8xf32>, vector<8x8x8xf32>, vector<8x8x8xf32>, vector<8x8x8xf32> -> vector<8x8x72xf32>
    %39 = vector.shape_cast %38 : vector<8x8x72xf32> to vector<64x72xf32>
    %c0_75 = arith.constant 0 : index
    %c0_76 = arith.constant 0 : index
    %40 = vector.load %arg4[%c0_75, %c0_76] : memref<72x8xf32, #tpu.memory_space<vmem>>, vector<72x8xf32>
    %cst_77 = arith.constant dense<0.000000e+00> : vector<64x8xf32>
    %41 = tpu.matmul %39, %40, %cst_77 {dimension_numbers = #tpu.dot_dimension_numbers<[1], [0], [0], [1], [0, 0, 1, 1], [], []>} : vector<64x72xf32>, vector<72x8xf32>, vector<64x8xf32> -> vector<64x8xf32>
    %c0_78 = arith.constant 0 : index
    %c0_79 = arith.constant 0 : index
    %42 = vector.load %arg5[%c0_78, %c0_79] : memref<1x8xf32, #tpu.memory_space<vmem>>, vector<1x8xf32>
    %43 = vector.broadcast %42 : vector<1x8xf32> to vector<64x8xf32>
    %44 = arith.addf %41, %43 : vector<64x8xf32>
    %c0_80 = arith.constant 0 : index
    %c0_81 = arith.constant 0 : index
    %c0_82 = arith.constant 0 : index
    %c0_83 = arith.constant 0 : index
    %45 = tpu.strided_load %arg1[%c0_80, %c0_81, %c0_82, %c0_83] {strides = array<i32: 1, 2, 2, 1>} : memref<1x16x16x4xf32, #tpu.memory_space<vmem>>, vector<1x8x8x4xf32>
    %46 = vector.shape_cast %45 : vector<1x8x8x4xf32> to vector<8x8x4xf32>
    %c0_84 = arith.constant 0 : index
    %c0_85 = arith.constant 0 : index
    %c1_86 = arith.constant 1 : index
    %c0_87 = arith.constant 0 : index
    %47 = tpu.strided_load %arg1[%c0_84, %c0_85, %c1_86, %c0_87] {strides = array<i32: 1, 2, 2, 1>} : memref<1x16x16x4xf32, #tpu.memory_space<vmem>>, vector<1x8x8x4xf32>
    %48 = vector.shape_cast %47 : vector<1x8x8x4xf32> to vector<8x8x4xf32>
    %49 = arith.addf %46, %48 : vector<8x8x4xf32>
    %c0_88 = arith.constant 0 : index
    %c1_89 = arith.constant 1 : index
    %c0_90 = arith.constant 0 : index
    %c0_91 = arith.constant 0 : index
    %50 = tpu.strided_load %arg1[%c0_88, %c1_89, %c0_90, %c0_91] {strides = array<i32: 1, 2, 2, 1>} : memref<1x16x16x4xf32, #tpu.memory_space<vmem>>, vector<1x8x8x4xf32>
    %51 = vector.shape_cast %50 : vector<1x8x8x4xf32> to vector<8x8x4xf32>
    %52 = arith.addf %49, %51 : vector<8x8x4xf32>
    %c0_92 = arith.constant 0 : index
    %c1_93 = arith.constant 1 : index
    %c1_94 = arith.constant 1 : index
    %c0_95 = arith.constant 0 : index
    %53 = tpu.strided_load %arg1[%c0_92, %c1_93, %c1_94, %c0_95] {strides = array<i32: 1, 2, 2, 1>} : memref<1x16x16x4xf32, #tpu.memory_space<vmem>>, vector<1x8x8x4xf32>
    %54 = vector.shape_cast %53 : vector<1x8x8x4xf32> to vector<8x8x4xf32>
    %55 = arith.addf %52, %54 : vector<8x8x4xf32>
    %56 = vector.shape_cast %55 : vector<8x8x4xf32> to vector<64x4xf32>
    %c0_96 = arith.constant 0 : index
    %c0_97 = arith.constant 0 : index
    %57 = vector.load %arg6[%c0_96, %c0_97] : memref<4x8xf32, #tpu.memory_space<vmem>>, vector<4x8xf32>
    %cst_98 = arith.constant dense<0.000000e+00> : vector<64x8xf32>
    %58 = tpu.matmul %56, %57, %cst_98 {dimension_numbers = #tpu.dot_dimension_numbers<[1], [0], [0], [1], [0, 0, 1, 1], [], []>} : vector<64x4xf32>, vector<4x8xf32>, vector<64x8xf32> -> vector<64x8xf32>
    %59 = arith.addf %44, %58 : vector<64x8xf32>
    %c0_99 = arith.constant 0 : index
    %c0_100 = arith.constant 0 : index
    %c0_101 = arith.constant 0 : index
    %60 = vector.load %arg7[%c0_99, %c0_100, %c0_101] : memref<1x64x8xf32, #tpu.memory_space<vmem>>, vector<1x64x8xf32>
    %61 = vector.shape_cast %60 : vector<1x64x8xf32> to vector<64x8xf32>
    %62 = vector.shape_cast %59 : vector<64x8xf32> to vector<1x64x8xf32>
    tpu.vector_store %arg7[%c0_99, %c0_100, %c0_101], %62 {strides = array<i32>} : memref<1x64x8xf32, #tpu.memory_space<vmem>>, vector<1x64x8xf32>,
    return
  }
  func.func @transform_0(%arg0: i32) -> (i32, i32, i32, i32) {
    %c0_i32 = arith.constant 0 : i32
    %c0_i32_0 = arith.constant 0 : i32
    %c0_i32_1 = arith.constant 0 : i32
    %c0_i32_2 = arith.constant 0 : i32
    return %arg0, %c0_i32, %c0_i32_0, %c0_i32_1 : i32, i32, i32, i32
  }
  func.func @transform_1(%arg0: i32) -> (i32, i32) {
    %c0_i32 = arith.constant 0 : i32
    %c0_i32_0 = arith.constant 0 : i32
    %c0_i32_1 = arith.constant 0 : i32
    return %c0_i32, %c0_i32_0 : i32, i32
  }
  func.func @transform_2(%arg0: i32) -> (i32, i32) {
    %c0_i32 = arith.constant 0 : i32
    %c0_i32_0 = arith.constant 0 : i32
    %c0_i32_1 = arith.constant 0 : i32
    return %c0_i32, %c0_i32_0 : i32, i32
  }
  func.func @transform_3(%arg0: i32) -> (i32, i32) {
    %c0_i32 = arith.constant 0 : i32
    %c0_i32_0 = arith.constant 0 : i32
    %c0_i32_1 = arith.constant 0 : i32
    return %c0_i32, %c0_i32_0 : i32, i32
  }
  func.func @transform_4(%arg0: i32) -> (i32, i32) {
    %c0_i32 = arith.constant 0 : i32
    %c0_i32_0 = arith.constant 0 : i32
    %c0_i32_1 = arith.constant 0 : i32
    return %c0_i32, %c0_i32_0 : i32, i32
  }
  func.func @transform_5(%arg0: i32) -> (i32, i32) {
    %c0_i32 = arith.constant 0 : i32
    %c0_i32_0 = arith.constant 0 : i32
    %c0_i32_1 = arith.constant 0 : i32
    return %c0_i32, %c0_i32_0 : i32, i32
  }
  func.func @transform_6(%arg0: i32) -> (i32, i32, i32) {
    %c0_i32 = arith.constant 0 : i32
    %c0_i32_0 = arith.constant 0 : i32
    %c0_i32_1 = arith.constant 0 : i32
    return %arg0, %c0_i32, %c0_i32_0 : i32, i32, i32
  }
}

</mosaic_0001>

<llo_original>
// kernel: resnet_basic_block.1
$region0: #{resnet_basic_block.1}
  #allocation0 [shape = 'u32[]', space=smem, size = 0x4, offset = 0x4, fixed_abs, tag = 'smem constant byte address 0x4 - core index']
  #allocation1 [shape = 'u32[144,128]{1,0:T(1,128)}', space=vmem, size = 0x12000, scoped, tag = 'internal scratch']
  #allocation2 [shape = 'f32[18,18,4]{2,1,0:T(8,128)}', space=vmem, size = 0x36000, scoped, tag = 'scratch operand']
  #allocation3 [shape = 'f32[10,10,8]{2,1,0:T(8,128)}', space=vmem, size = 0x14000, scoped, tag = 'scratch operand']
  %s0 = inlined_call_operand.vmem [shape: f32[2,16,16,4], index: 0, kind: input, shape index: {}]
  %s1 = inlined_call_operand.vmem [shape: f32[36,8], index: 1, kind: input, shape index: {}]
  %s2 = inlined_call_operand.vmem [shape: f32[1,8], index: 2, kind: input, shape index: {}]
  %s3 = inlined_call_operand.vmem [shape: f32[72,8], index: 3, kind: input, shape index: {}]
  %s4 = inlined_call_operand.vmem [shape: f32[1,8], index: 4, kind: input, shape index: {}]
  %s5 = inlined_call_operand.vmem [shape: f32[4,8], index: 5, kind: input, shape index: {}]
  %s6 = inlined_call_operand.vmem [shape: f32[2,64,8], index: 6, kind: output, shape index: {}]
  %s7 = sld [smem:[#allocation0]]
  $region57: #{resnet_basic_block.1} parent=0
    _
  %s9 = ssub.s32 1, %s7
  %s10 = scalar_select 0, %s9, %s7
  loop: start=0, step=1, limit=4
  $region2: #{resnet_basic_block.1} parent=0 // loop_pre_header
    _
  $region3: #{resnet_basic_block.1} parent=0 // loop_header
    %s12 = sphi 0, %s16
    %p13 = scmp.ge.s32.totalorder %s12, 4
    %s22 = sphi 0, %s24
    %s25 = sphi 0, %s22
    %s26 = sphi 0, %s25
    %s42 = sphi 0, %s26
    %s46 = sphi 0, %s46
    %s48 = sphi 0, %s46
    %s49 = sphi 0, %s48
    %s63 = sphi 0, %s49
    %s67 = sphi 0, %s67
    %s69 = sphi 0, %s67
    %s70 = sphi 0, %s69
    %s84 = sphi 0, %s70
    %s88 = sphi 0, %s88
    %s90 = sphi 0, %s88
    %s91 = sphi 0, %s90
    %s105 = sphi 0, %s91
    %s109 = sphi 0, %s109
    %s111 = sphi 0, %s109
    %s112 = sphi 0, %s111
    %s126 = sphi 0, %s112
    %s130 = sphi 0, %s130
    %s132 = sphi 0, %s130
    %s133 = sphi 0, %s132
    %s147 = sphi 0, %s133
    %s153 = sphi 0, %s155
    %s156 = sphi 0, %s153
    %s157 = sphi 0, %s156
    %s173 = sphi 0, %s157
  $region4: #{resnet_basic_block.1} parent=0 // loop_header_branch
    %15 = sbr.rel (%p13) target = $region8
  $region5: #{resnet_basic_block.1} parent=0 // loop_body
    %s17 = ssub.s32 %s12, 1
    %s18 = ssub.s32 %s12, 2
    %s19 = sadd.s32 %s12, 1
    %s20 = ssub.s32 %s12, %s19
    %p21 = scmp.eq.s32.totalorder %s20, 0
    %s23 = sadd.s32 %s22, 1
    %s24 = scalar_select %p21, %s22, %s23
    %p27 = pneg %p21
    %p28 = scmp.eq.s32.totalorder %s12, 1
    %p29 = por %p27, %p28
    %p30 = scmp.ne.s32.totalorder %s22, %s25
    %p31 = scmp.eq.s32.totalorder %s12, 0
    %p32 = por %p30, %p31
    %p33 = scmp.ne.s32.totalorder %s22, %s25
    %p34 = scmp.eq.s32.totalorder %s17, 1
    %p35 = por %p33, %p34
    %p36 = scmp.ne.s32.totalorder %s25, %s26
    %p37 = scmp.eq.s32.totalorder %s17, 0
    %p38 = por %p36, %p37
    %p39 = scmp.ne.s32.totalorder %s25, %s26
    %p40 = scmp.eq.s32.totalorder %s18, 1
    %p41 = por %p39, %p40
    %p43 = scmp.ne.s32.totalorder %s26, %s42
    %p44 = scmp.eq.s32.totalorder %s18, 0
    %p45 = por %p43, %p44
    %s47 = sadd.s32 %s46, 1
    %p50 = scmp.eq.s32.totalorder %s12, 1
    %p51 = scmp.ne.s32.totalorder %s46, %s48
    %p52 = scmp.eq.s32.totalorder %s12, 0
    %p53 = por %p51, %p52
    %p54 = scmp.ne.s32.totalorder %s46, %s48
    %p55 = scmp.eq.s32.totalorder %s17, 1
    %p56 = por %p54, %p55
    %p57 = scmp.ne.s32.totalorder %s48, %s49
    %p58 = scmp.eq.s32.totalorder %s17, 0
    %p59 = por %p57, %p58
    %p60 = scmp.ne.s32.totalorder %s48, %s49
    %p61 = scmp.eq.s32.totalorder %s18, 1
    %p62 = por %p60, %p61
    %p64 = scmp.ne.s32.totalorder %s49, %s63
    %p65 = scmp.eq.s32.totalorder %s18, 0
    %p66 = por %p64, %p65
    %s68 = sadd.s32 %s67, 1
    %p71 = scmp.eq.s32.totalorder %s12, 1
    %p72 = scmp.ne.s32.totalorder %s67, %s69
    %p73 = scmp.eq.s32.totalorder %s12, 0
    %p74 = por %p72, %p73
    %p75 = scmp.ne.s32.totalorder %s67, %s69
    %p76 = scmp.eq.s32.totalorder %s17, 1
    %p77 = por %p75, %p76
    %p78 = scmp.ne.s32.totalorder %s69, %s70
    %p79 = scmp.eq.s32.totalorder %s17, 0
    %p80 = por %p78, %p79
    %p81 = scmp.ne.s32.totalorder %s69, %s70
    %p82 = scmp.eq.s32.totalorder %s18, 1
    %p83 = por %p81, %p82
    %p85 = scmp.ne.s32.totalorder %s70, %s84
    %p86 = scmp.eq.s32.totalorder %s18, 0
    %p87 = por %p85, %p86
    %s89 = sadd.s32 %s88, 1
    %p92 = scmp.eq.s32.totalorder %s12, 1
    %p93 = scmp.ne.s32.totalorder %s88, %s90
    %p94 = scmp.eq.s32.totalorder %s12, 0
    %p95 = por %p93, %p94
    %p96 = scmp.ne.s32.totalorder %s88, %s90
    %p97 = scmp.eq.s32.totalorder %s17, 1
    %p98 = por %p96, %p97
    %p99 = scmp.ne.s32.totalorder %s90, %s91
    %p100 = scmp.eq.s32.totalorder %s17, 0
    %p101 = por %p99, %p100
    %p102 = scmp.ne.s32.totalorder %s90, %s91
    %p103 = scmp.eq.s32.totalorder %s18, 1
    %p104 = por %p102, %p103
    %p106 = scmp.ne.s32.totalorder %s91, %s105
    %p107 = scmp.eq.s32.totalorder %s18, 0
    %p108 = por %p106, %p107
    %s110 = sadd.s32 %s109, 1
    %p113 = scmp.eq.s32.totalorder %s12, 1
    %p114 = scmp.ne.s32.totalorder %s109, %s111
    %p115 = scmp.eq.s32.totalorder %s12, 0
    %p116 = por %p114, %p115
    %p117 = scmp.ne.s32.totalorder %s109, %s111
    %p118 = scmp.eq.s32.totalorder %s17, 1
    %p119 = por %p117, %p118
    %p120 = scmp.ne.s32.totalorder %s111, %s112
    %p121 = scmp.eq.s32.totalorder %s17, 0
    %p122 = por %p120, %p121
    %p123 = scmp.ne.s32.totalorder %s111, %s112
    %p124 = scmp.eq.s32.totalorder %s18, 1
    %p125 = por %p123, %p124
    %p127 = scmp.ne.s32.totalorder %s112, %s126
    %p128 = scmp.eq.s32.totalorder %s18, 0
    %p129 = por %p127, %p128
    %s131 = sadd.s32 %s130, 1
    %p134 = scmp.eq.s32.totalorder %s12, 1
    %p135 = scmp.ne.s32.totalorder %s130, %s132
    %p136 = scmp.eq.s32.totalorder %s12, 0
    %p137 = por %p135, %p136
    %p138 = scmp.ne.s32.totalorder %s130, %s132
    %p139 = scmp.eq.s32.totalorder %s17, 1
    %p140 = por %p138, %p139
    %p141 = scmp.ne.s32.totalorder %s132, %s133
    %p142 = scmp.eq.s32.totalorder %s17, 0
    %p143 = por %p141, %p142
    %p144 = scmp.ne.s32.totalorder %s132, %s133
    %p145 = scmp.eq.s32.totalorder %s18, 1
    %p146 = por %p144, %p145
    %p148 = scmp.ne.s32.totalorder %s133, %s147
    %p149 = scmp.eq.s32.totalorder %s18, 0
    %p150 = por %p148, %p149
    %s151 = ssub.s32 %s12, %s19
    %p152 = scmp.eq.s32.totalorder %s151, 0
    %s154 = sadd.s32 %s153, 1
    %s155 = scalar_select %p152, %s153, %s154
    %p158 = pneg %p152
    %p159 = scmp.eq.s32.totalorder %s12, 1
    %p160 = por %p158, %p159
    %p161 = scmp.ne.s32.totalorder %s153, %s156
    %p162 = scmp.eq.s32.totalorder %s12, 0
    %p163 = por %p161, %p162
    %p164 = scmp.ne.s32.totalorder %s153, %s156
    %p165 = scmp.eq.s32.totalorder %s17, 1
    %p166 = por %p164, %p165
    %p167 = scmp.ne.s32.totalorder %s156, %s157
    %p168 = scmp.eq.s32.totalorder %s17, 0
    %p169 = por %p167, %p168
    %p170 = scmp.ne.s32.totalorder %s156, %s157
    %p171 = scmp.eq.s32.totalorder %s18, 1
    %p172 = por %p170, %p171
    %p174 = scmp.ne.s32.totalorder %s157, %s173
    %p175 = scmp.eq.s32.totalorder %s18, 0
    %p176 = por %p174, %p175
    %p177 = scmp.le.s32.totalorder 1, %s12
    %p178 = scmp.lt.s32.totalorder %s12, 3
    %p179 = pnand %p177, %p178
    %p180 = pneg %p179
    // Predicated region
    $region9: #{resnet_basic_block.1} parent=5 // pred_check
      _
    $region10: #{resnet_basic_block.1} parent=5 // pred_check_branch
      %182 = sbr.rel (%p179) target = $region12
    $region11: #{resnet_basic_block.1} parent=5 // pred_region
      %s183 = ssub.s32 %s12, 1
      // Predicated region
      $region13: #{resnet_basic_block.1} parent=11 // pred_check
        %p184 = pneg %p59
      $region14: #{resnet_basic_block.1} parent=11 // pred_check_branch
        %186 = sbr.rel (%p184) target = $region16
      $region15: #{resnet_basic_block.1} parent=11 // pred_region
        _
      $region16: #{resnet_basic_block.1} parent=11 // pred_fallthru
        _
      // Predicated region
      $region17: #{resnet_basic_block.1} parent=11 // pred_check
        %p187 = pneg %p80
      $region18: #{resnet_basic_block.1} parent=11 // pred_check_branch
        %189 = sbr.rel (%p187) target = $region20
      $region19: #{resnet_basic_block.1} parent=11 // pred_region
        _
      $region20: #{resnet_basic_block.1} parent=11 // pred_fallthru
        _
      // Predicated region
      $region21: #{resnet_basic_block.1} parent=11 // pred_check
        %p190 = pneg %p101
      $region22: #{resnet_basic_block.1} parent=11 // pred_check_branch
        %192 = sbr.rel (%p190) target = $region24
      $region23: #{resnet_basic_block.1} parent=11 // pred_region
        _
      $region24: #{resnet_basic_block.1} parent=11 // pred_fallthru
        _
      // Predicated region
      $region25: #{resnet_basic_block.1} parent=11 // pred_check
        %p193 = pneg %p122
      $region26: #{resnet_basic_block.1} parent=11 // pred_check_branch
        %195 = sbr.rel (%p193) target = $region28
      $region27: #{resnet_basic_block.1} parent=11 // pred_region
        _
      $region28: #{resnet_basic_block.1} parent=11 // pred_fallthru
        _
      // Predicated region
      $region29: #{resnet_basic_block.1} parent=11 // pred_check
        %p196 = pneg %p143
      $region30: #{resnet_basic_block.1} parent=11 // pred_check_branch
        %198 = sbr.rel (%p196) target = $region32
      $region31: #{resnet_basic_block.1} parent=11 // pred_region
        _
      $region32: #{resnet_basic_block.1} parent=11 // pred_fallthru
        _
    $region12: #{resnet_basic_block.1} parent=5 // pred_fallthru
      _
    %p199 = scmp.lt.s32.totalorder %s12, 2
    // Predicated region
    $region33: #{resnet_basic_block.1} parent=5 // pred_check
      %p200 = pneg %p199
    $region34: #{resnet_basic_block.1} parent=5 // pred_check_branch
      %202 = sbr.rel (%p200) target = $region36
    $region35: #{resnet_basic_block.1} parent=5 // pred_region
      // Predicated region
      $region37: #{resnet_basic_block.1} parent=35 // pred_check
        %p203 = pneg %p32
      $region38: #{resnet_basic_block.1} parent=35 // pred_check_branch
        %205 = sbr.rel (%p203) target = $region40
      $region39: #{resnet_basic_block.1} parent=35 // pred_region
        %p206 = scmp.lt.s32.totalorder %s12, 1
        %s207 = scalar_select %p206, %s12, 1
        %s208 = smul.addr %s207, 32
        %s209 = smul.addr %s208, 8
        %s210 = scalar_lea.vmem %s0, %s209
      $region40: #{resnet_basic_block.1} parent=35 // pred_fallthru
        _
    $region36: #{resnet_basic_block.1} parent=5 // pred_fallthru
      _
    %p211 = scmp.le.s32.totalorder 1, %s12
    %p212 = scmp.lt.s32.totalorder %s12, 3
    %p213 = pnand %p211, %p212
    %p214 = pneg %p213
    // Predicated region
    $region41: #{resnet_basic_block.1} parent=5 // pred_check
      _
    $region42: #{resnet_basic_block.1} parent=5 // pred_check_branch
      %216 = sbr.rel (%p213) target = $region44
    $region43: #{resnet_basic_block.1} parent=5 // pred_region
      %s217 = ssub.s32 %s12, 1
      %p218 = scmp.lt.s32.totalorder %s17, 1
      %s219 = scalar_select %p218, %s17, 1
      %s220 = smul.addr %s219, 32
      %s221 = smul.addr %s220, 8
      %s222 = scalar_lea.vmem %s0, %s221
      %p223 = pneg %p38
      %p224 = pneg %p35
      %p225 = pneg %p59
      %p226 = pneg %p56
      %p227 = pneg %p80
      %p228 = pneg %p77
      %p229 = pneg %p101
      %p230 = pneg %p98
      %p231 = pneg %p122
      %p232 = pneg %p119
      %p233 = pneg %p143
      %p234 = pneg %p140
      %p235 = pneg %p169
      %p236 = pneg %p166
      %p237 = scmp.lt.s32.totalorder %s17, 1
      %s238 = scalar_select %p237, %s17, 1
      %s239 = smul.addr %s238, 8
      %s240 = smul.addr %s239, 8
      %s241 = scalar_lea.vmem %s6, %s240
      %p242 = scmp.lt.s32.totalorder %s17, 1
      %s243 = scalar_select %p242, %s17, 1
      %s244 = smul.addr %s243, 32
      %s245 = smul.addr %s244, 8
      %s246 = scalar_lea.vmem %s0, %s245
      %p247 = scmp.lt.s32.totalorder %s17, 1
      %s248 = scalar_select %p247, %s17, 1
      %s249 = smul.addr %s248, 8
      %s250 = smul.addr %s249, 8
      %s251 = scalar_lea.vmem %s6, %s250
      %vm252 = vcmask 31744
      %253 = vst.msk [vmem:[#allocation2] sm:$0xff] %vm252, 0.0
      %254 = vst.msk [vmem:[#allocation2 + $0x8] sm:$0xff] %vm252, 0.0
      %vm255 = vcmask 25600
      %256 = vst.msk [vmem:[#allocation2 + $0x10] sm:$0x3] %vm255, 0.0
      %257 = vst.msk [vmem:[#allocation2 + $0x18] sm:$0xff] %vm252, 0.0
      %258 = vst.msk [vmem:[#allocation2 + $0x20] sm:$0xff] %vm252, 0.0
      %259 = vst.msk [vmem:[#allocation2 + $0x28] sm:$0x3] %vm255, 0.0
      %260 = vst.msk [vmem:[#allocation2 + $0x30] sm:$0xff] %vm252, 0.0
      %261 = vst.msk [vmem:[#allocation2 + $0x38] sm:$0xff] %vm252, 0.0
      %262 = vst.msk [vmem:[#allocation2 + $0x40] sm:$0x3] %vm255, 0.0
      %263 = vst.msk [vmem:[#allocation2 + $0x48] sm:$0xff] %vm252, 0.0
      %264 = vst.msk [vmem:[#allocation2 + $0x50] sm:$0xff] %vm252, 0.0
      %265 = vst.msk [vmem:[#allocation2 + $0x58] sm:$0x3] %vm255, 0.0
      %266 = vst.msk [vmem:[#allocation2 + $0x60] sm:$0xff] %vm252, 0.0
      %267 = vst.msk [vmem:[#allocation2 + $0x68] sm:$0xff] %vm252, 0.0
      %268 = vst.msk [vmem:[#allocation2 + $0x70] sm:$0x3] %vm255, 0.0
      %269 = vst.msk [vmem:[#allocation2 + $0x78] sm:$0xff] %vm252, 0.0
      %270 = vst.msk [vmem:[#allocation2 + $0x80] sm:$0xff] %vm252, 0.0
      %271 = vst.msk [vmem:[#allocation2 + $0x88] sm:$0x3] %vm255, 0.0
      %272 = vst.msk [vmem:[#allocation2 + $0x90] sm:$0xff] %vm252, 0.0
      %273 = vst.msk [vmem:[#allocation2 + $0x98] sm:$0xff] %vm252, 0.0
      %274 = vst.msk [vmem:[#allocation2 + $0xa0] sm:$0x3] %vm255, 0.0
      %275 = vst.msk [vmem:[#allocation2 + $0xa8] sm:$0xff] %vm252, 0.0
      %276 = vst.msk [vmem:[#allocation2 + $0xb0] sm:$0xff] %vm252, 0.0
      %277 = vst.msk [vmem:[#allocation2 + $0xb8] sm:$0x3] %vm255, 0.0
      %278 = vst.msk [vmem:[#allocation2 + $0xc0] sm:$0xff] %vm252, 0.0
      %279 = vst.msk [vmem:[#allocation2 + $0xc8] sm:$0xff] %vm252, 0.0
      %280 = vst.msk [vmem:[#allocation2 + $0xd0] sm:$0x3] %vm255, 0.0
      %281 = vst.msk [vmem:[#allocation2 + $0xd8] sm:$0xff] %vm252, 0.0
      %282 = vst.msk [vmem:[#allocation2 + $0xe0] sm:$0xff] %vm252, 0.0
      %283 = vst.msk [vmem:[#allocation2 + $0xe8] sm:$0x3] %vm255, 0.0
      %284 = vst.msk [vmem:[#allocation2 + $0xf0] sm:$0xff] %vm252, 0.0
      %285 = vst.msk [vmem:[#allocation2 + $0xf8] sm:$0xff] %vm252, 0.0
      %286 = vst.msk [vmem:[#allocation2 + $0x100] sm:$0x3] %vm255, 0.0
      %287 = vst.msk [vmem:[#allocation2 + $0x108] sm:$0xff] %vm252, 0.0
      %288 = vst.msk [vmem:[#allocation2 + $0x110] sm:$0xff] %vm252, 0.0
      %289 = vst.msk [vmem:[#allocation2 + $0x118] sm:$0x3] %vm255, 0.0
      %290 = vst.msk [vmem:[#allocation2 + $0x120] sm:$0xff] %vm252, 0.0
      %291 = vst.msk [vmem:[#allocation2 + $0x128] sm:$0xff] %vm252, 0.0
      %292 = vst.msk [vmem:[#allocation2 + $0x130] sm:$0x3] %vm255, 0.0
      %293 = vst.msk [vmem:[#allocation2 + $0x138] sm:$0xff] %vm252, 0.0
      %294 = vst.msk [vmem:[#allocation2 + $0x140] sm:$0xff] %vm252, 0.0
      %295 = vst.msk [vmem:[#allocation2 + $0x148] sm:$0x3] %vm255, 0.0
      %296 = vst.msk [vmem:[#allocation2 + $0x150] sm:$0xff] %vm252, 0.0
      %297 = vst.msk [vmem:[#allocation2 + $0x158] sm:$0xff] %vm252, 0.0
      %298 = vst.msk [vmem:[#allocation2 + $0x160] sm:$0x3] %vm255, 0.0
      %299 = vst.msk [vmem:[#allocation2 + $0x168] sm:$0xff] %vm252, 0.0
      %300 = vst.msk [vmem:[#allocation2 + $0x170] sm:$0xff] %vm252, 0.0
      %301 = vst.msk [vmem:[#allocation2 + $0x178] sm:$0x3] %vm255, 0.0
      %302 = vst.msk [vmem:[#allocation2 + $0x180] sm:$0xff] %vm252, 0.0
      %303 = vst.msk [vmem:[#allocation2 + $0x188] sm:$0xff] %vm252, 0.0
      %304 = vst.msk [vmem:[#allocation2 + $0x190] sm:$0x3] %vm255, 0.0
      %305 = vst.msk [vmem:[#allocation2 + $0x198] sm:$0xff] %vm252, 0.0
      %306 = vst.msk [vmem:[#allocation2 + $0x1a0] sm:$0xff] %vm252, 0.0
      %307 = vst.msk [vmem:[#allocation2 + $0x1a8] sm:$0x3] %vm255, 0.0
      %v308 = vld [vmem:[%s246] sm:$0xff]
      %v309 = vld [vmem:[%s246 + $0x8] sm:$0xff]
      %v310 = vld [vmem:[%s246 + $0x10] sm:$0xff]
      %v311 = vld [vmem:[%s246 + $0x18] sm:$0xff]
      %v312 = vld [vmem:[%s246 + $0x20] sm:$0xff]
      %v313 = vld [vmem:[%s246 + $0x28] sm:$0xff]
      %v314 = vld [vmem:[%s246 + $0x30] sm:$0xff]
      %v315 = vld [vmem:[%s246 + $0x38] sm:$0xff]
      %v316 = vld [vmem:[%s246 + $0x40] sm:$0xff]
      %v317 = vld [vmem:[%s246 + $0x48] sm:$0xff]
      %v318 = vld [vmem:[%s246 + $0x50] sm:$0xff]
      %v319 = vld [vmem:[%s246 + $0x58] sm:$0xff]
      %v320 = vld [vmem:[%s246 + $0x60] sm:$0xff]
      %v321 = vld [vmem:[%s246 + $0x68] sm:$0xff]
      %v322 = vld [vmem:[%s246 + $0x70] sm:$0xff]
      %v323 = vld [vmem:[%s246 + $0x78] sm:$0xff]
      %v324 = vld [vmem:[%s246 + $0x80] sm:$0xff]
      %v325 = vld [vmem:[%s246 + $0x88] sm:$0xff]
      %v326 = vld [vmem:[%s246 + $0x90] sm:$0xff]
      %v327 = vld [vmem:[%s246 + $0x98] sm:$0xff]
      %v328 = vld [vmem:[%s246 + $0xa0] sm:$0xff]
      %v329 = vld [vmem:[%s246 + $0xa8] sm:$0xff]
      %v330 = vld [vmem:[%s246 + $0xb0] sm:$0xff]
      %v331 = vld [vmem:[%s246 + $0xb8] sm:$0xff]
      %v332 = vld [vmem:[%s246 + $0xc0] sm:$0xff]
      %v333 = vld [vmem:[%s246 + $0xc8] sm:$0xff]
      %v334 = vld [vmem:[%s246 + $0xd0] sm:$0xff]
      %v335 = vld [vmem:[%s246 + $0xd8] sm:$0xff]
      %v336 = vld [vmem:[%s246 + $0xe0] sm:$0xff]
      %v337 = vld [vmem:[%s246 + $0xe8] sm:$0xff]
      %v338 = vld [vmem:[%s246 + $0xf0] sm:$0xff]
      %v339 = vld [vmem:[%s246 + $0xf8] sm:$0xff]
      %v340 = vmax.f32 %v308, 0.0
      %v341 = vmax.f32 %v309, 0.0
      %v342 = vmax.f32 %v310, 0.0
      %v343 = vmax.f32 %v311, 0.0
      %v344 = vmax.f32 %v312, 0.0
      %v345 = vmax.f32 %v313, 0.0
      %v346 = vmax.f32 %v314, 0.0
      %v347 = vmax.f32 %v315, 0.0
      %v348 = vmax.f32 %v316, 0.0
      %v349 = vmax.f32 %v317, 0.0
      %v350 = vmax.f32 %v318, 0.0
      %v351 = vmax.f32 %v319, 0.0
      %v352 = vmax.f32 %v320, 0.0
      %v353 = vmax.f32 %v321, 0.0
      %v354 = vmax.f32 %v322, 0.0
      %v355 = vmax.f32 %v323, 0.0
      %v356 = vmax.f32 %v324, 0.0
      %v357 = vmax.f32 %v325, 0.0
      %v358 = vmax.f32 %v326, 0.0
      %v359 = vmax.f32 %v327, 0.0
      %v360 = vmax.f32 %v328, 0.0
      %v361 = vmax.f32 %v329, 0.0
      %v362 = vmax.f32 %v330, 0.0
      %v363 = vmax.f32 %v331, 0.0
      %v364 = vmax.f32 %v332, 0.0
      %v365 = vmax.f32 %v333, 0.0
      %v366 = vmax.f32 %v334, 0.0
      %v367 = vmax.f32 %v335, 0.0
      %v368 = vmax.f32 %v336, 0.0
      %v369 = vmax.f32 %v337, 0.0
      %v370 = vmax.f32 %v338, 0.0
      %v371 = vmax.f32 %v339, 0.0
      %s372 = scalar_lea.vmem [#allocation2], 24
      %373 = vst.msk [vmem:[%s372 + $0x1] sm:$0xff] %vm252, %v340
      %374 = vst.msk [vmem:[%s372 + $0x9] sm:$0xff] %vm252, %v341
      %375 = vst.msk [vmem:[%s372 + $0x19] sm:$0xff] %vm252, %v342
      %376 = vst.msk [vmem:[%s372 + $0x21] sm:$0xff] %vm252, %v343
      %377 = vst.msk [vmem:[%s372 + $0x31] sm:$0xff] %vm252, %v344
      %378 = vst.msk [vmem:[%s372 + $0x39] sm:$0xff] %vm252, %v345
      %379 = vst.msk [vmem:[%s372 + $0x49] sm:$0xff] %vm252, %v346
      %380 = vst.msk [vmem:[%s372 + $0x51] sm:$0xff] %vm252, %v347
      %381 = vst.msk [vmem:[%s372 + $0x61] sm:$0xff] %vm252, %v348
      %382 = vst.msk [vmem:[%s372 + $0x69] sm:$0xff] %vm252, %v349
      %383 = vst.msk [vmem:[%s372 + $0x79] sm:$0xff] %vm252, %v350
      %384 = vst.msk [vmem:[%s372 + $0x81] sm:$0xff] %vm252, %v351
      %385 = vst.msk [vmem:[%s372 + $0x91] sm:$0xff] %vm252, %v352
      %386 = vst.msk [vmem:[%s372 + $0x99] sm:$0xff] %vm252, %v353
      %387 = vst.msk [vmem:[%s372 + $0xa9] sm:$0xff] %vm252, %v354
      %388 = vst.msk [vmem:[%s372 + $0xb1] sm:$0xff] %vm252, %v355
      %389 = vst.msk [vmem:[%s372 + $0xc1] sm:$0xff] %vm252, %v356
      %390 = vst.msk [vmem:[%s372 + $0xc9] sm:$0xff] %vm252, %v357
      %391 = vst.msk [vmem:[%s372 + $0xd9] sm:$0xff] %vm252, %v358
      %392 = vst.msk [vmem:[%s372 + $0xe1] sm:$0xff] %vm252, %v359
      %393 = vst.msk [vmem:[%s372 + $0xf1] sm:$0xff] %vm252, %v360
      %394 = vst.msk [vmem:[%s372 + $0xf9] sm:$0xff] %vm252, %v361
      %395 = vst.msk [vmem:[%s372 + $0x109] sm:$0xff] %vm252, %v362
      %396 = vst.msk [vmem:[%s372 + $0x111] sm:$0xff] %vm252, %v363
      %397 = vst.msk [vmem:[%s372 + $0x121] sm:$0xff] %vm252, %v364
      %398 = vst.msk [vmem:[%s372 + $0x129] sm:$0xff] %vm252, %v365
      %399 = vst.msk [vmem:[%s372 + $0x139] sm:$0xff] %vm252, %v366
      %400 = vst.msk [vmem:[%s372 + $0x141] sm:$0xff] %vm252, %v367
      %401 = vst.msk [vmem:[%s372 + $0x151] sm:$0xff] %vm252, %v368
      %402 = vst.msk [vmem:[%s372 + $0x159] sm:$0xff] %vm252, %v369
      %403 = vst.msk [vmem:[%s372 + $0x169] sm:$0xff] %vm252, %v370
      %404 = vst.msk [vmem:[%s372 + $0x171] sm:$0xff] %vm252, %v371
      %v405 = vld [vmem:[#allocation2] ss:$2 sm:$0xff]
      %s406 = scalar_lea.vmem [#allocation2], 48
      %v407 = vld [vmem:[%s406] ss:$2 sm:$0xff]
      %s408 = scalar_lea.vmem [#allocation2], 96
      %v409 = vld [vmem:[%s408] ss:$2 sm:$0xff]
      %s410 = scalar_lea.vmem [#allocation2], 144
      %v411 = vld [vmem:[%s410] ss:$2 sm:$0xff]
      %s412 = scalar_lea.vmem [#allocation2], 192
      %v413 = vld [vmem:[%s412] ss:$2 sm:$0xff]
      %s414 = scalar_lea.vmem [#allocation2], 240
      %v415 = vld [vmem:[%s414] ss:$2 sm:$0xff]
      %s416 = scalar_lea.vmem [#allocation2], 288
      %v417 = vld [vmem:[%s416] ss:$2 sm:$0xff]
      %s418 = scalar_lea.vmem [#allocation2], 336
      %v419 = vld [vmem:[%s418] ss:$2 sm:$0xff]
      %s420 = scalar_lea.vmem [#allocation2], 1
      %v421 = vld [vmem:[%s420] ss:$2 sm:$0xff]
      %s422 = scalar_lea.vmem [#allocation2], 49
      %v423 = vld [vmem:[%s422] ss:$2 sm:$0xff]
      %s424 = scalar_lea.vmem [#allocation2], 97
      %v425 = vld [vmem:[%s424] ss:$2 sm:$0xff]
      %s426 = scalar_lea.vmem [#allocation2], 145
      %v427 = vld [vmem:[%s426] ss:$2 sm:$0xff]
      %s428 = scalar_lea.vmem [#allocation2], 193
      %v429 = vld [vmem:[%s428] ss:$2 sm:$0xff]
      %s430 = scalar_lea.vmem [#allocation2], 241
      %v431 = vld [vmem:[%s430] ss:$2 sm:$0xff]
      %s432 = scalar_lea.vmem [#allocation2], 289
      %v433 = vld [vmem:[%s432] ss:$2 sm:$0xff]
      %s434 = scalar_lea.vmem [#allocation2], 337
      %v435 = vld [vmem:[%s434] ss:$2 sm:$0xff]
      %s436 = scalar_lea.vmem [#allocation2], 2
      %v437 = vld [vmem:[%s436] ss:$2 sm:$0xff]
      %s438 = scalar_lea.vmem [#allocation2], 50
      %v439 = vld [vmem:[%s438] ss:$2 sm:$0xff]
      %s440 = scalar_lea.vmem [#allocation2], 98
      %v441 = vld [vmem:[%s440] ss:$2 sm:$0xff]
      %s442 = scalar_lea.vmem [#allocation2], 146
      %v443 = vld [vmem:[%s442] ss:$2 sm:$0xff]
      %s444 = scalar_lea.vmem [#allocation2], 194
      %v445 = vld [vmem:[%s444] ss:$2 sm:$0xff]
      %s446 = scalar_lea.vmem [#allocation2], 242
      %v447 = vld [vmem:[%s446] ss:$2 sm:$0xff]
      %s448 = scalar_lea.vmem [#allocation2], 290
      %v449 = vld [vmem:[%s448] ss:$2 sm:$0xff]
      %s450 = scalar_lea.vmem [#allocation2], 338
      %v451 = vld [vmem:[%s450] ss:$2 sm:$0xff]
      %v452 = vld [vmem:[%s372] ss:$2 sm:$0xff]
      %s453 = scalar_lea.vmem %s372, 48 [#allocation2]
      %v454 = vld [vmem:[%s453] ss:$2 sm:$0xff]
      %s455 = scalar_lea.vmem %s372, 96 [#allocation2]
      %v456 = vld [vmem:[%s455] ss:$2 sm:$0xff]
      %s457 = scalar_lea.vmem %s372, 144 [#allocation2]
      %v458 = vld [vmem:[%s457] ss:$2 sm:$0xff]
      %s459 = scalar_lea.vmem %s372, 192 [#allocation2]
      %v460 = vld [vmem:[%s459] ss:$2 sm:$0xff]
      %s461 = scalar_lea.vmem %s372, 240 [#allocation2]
      %v462 = vld [vmem:[%s461] ss:$2 sm:$0xff]
      %s463 = scalar_lea.vmem %s372, 288 [#allocation2]
      %v464 = vld [vmem:[%s463] ss:$2 sm:$0xff]
      %s465 = scalar_lea.vmem %s372, 336 [#allocation2]
      %v466 = vld [vmem:[%s465] ss:$2 sm:$0xff]
      %s467 = scalar_lea.vmem %s372, 1 [#allocation2]
      %v468 = vld [vmem:[%s467] ss:$2 sm:$0xff]
      %s469 = scalar_lea.vmem %s372, 49 [#allocation2]
      %v470 = vld [vmem:[%s469] ss:$2 sm:$0xff]
      %s471 = scalar_lea.vmem %s372, 97 [#allocation2]
      %v472 = vld [vmem:[%s471] ss:$2 sm:$0xff]
      %s473 = scalar_lea.vmem %s372, 145 [#allocation2]
      %v474 = vld [vmem:[%s473] ss:$2 sm:$0xff]
      %s475 = scalar_lea.vmem %s372, 193 [#allocation2]
      %v476 = vld [vmem:[%s475] ss:$2 sm:$0xff]
      %s477 = scalar_lea.vmem %s372, 241 [#allocation2]
      %v478 = vld [vmem:[%s477] ss:$2 sm:$0xff]
      %s479 = scalar_lea.vmem %s372, 289 [#allocation2]
      %v480 = vld [vmem:[%s479] ss:$2 sm:$0xff]
      %s481 = scalar_lea.vmem %s372, 337 [#allocation2]
      %v482 = vld [vmem:[%s481] ss:$2 sm:$0xff]
      %s483 = scalar_lea.vmem %s372, 2 [#allocation2]
      %v484 = vld [vmem:[%s483] ss:$2 sm:$0xff]
      %s485 = scalar_lea.vmem %s372, 50 [#allocation2]
      %v486 = vld [vmem:[%s485] ss:$2 sm:$0xff]
      %s487 = scalar_lea.vmem %s372, 98 [#allocation2]
      %v488 = vld [vmem:[%s487] ss:$2 sm:$0xff]
      %s489 = scalar_lea.vmem %s372, 146 [#allocation2]
      %v490 = vld [vmem:[%s489] ss:$2 sm:$0xff]
      %s491 = scalar_lea.vmem %s372, 194 [#allocation2]
      %v492 = vld [vmem:[%s491] ss:$2 sm:$0xff]
      %s493 = scalar_lea.vmem %s372, 242 [#allocation2]
      %v494 = vld [vmem:[%s493] ss:$2 sm:$0xff]
      %s495 = scalar_lea.vmem %s372, 290 [#allocation2]
      %v496 = vld [vmem:[%s495] ss:$2 sm:$0xff]
      %s497 = scalar_lea.vmem %s372, 338 [#allocation2]
      %v498 = vld [vmem:[%s497] ss:$2 sm:$0xff]
      %s499 = scalar_lea.vmem [#allocation2], 48
      %v500 = vld [vmem:[%s499] ss:$2 sm:$0xff]
      %s501 = scalar_lea.vmem %s499, 48 [#allocation2]
      %v502 = vld [vmem:[%s501] ss:$2 sm:$0xff]
      %s503 = scalar_lea.vmem %s499, 96 [#allocation2]
      %v504 = vld [vmem:[%s503] ss:$2 sm:$0xff]
      %s505 = scalar_lea.vmem %s499, 144 [#allocation2]
      %v506 = vld [vmem:[%s505] ss:$2 sm:$0xff]
      %s507 = scalar_lea.vmem %s499, 192 [#allocation2]
      %v508 = vld [vmem:[%s507] ss:$2 sm:$0xff]
      %s509 = scalar_lea.vmem %s499, 240 [#allocation2]
      %v510 = vld [vmem:[%s509] ss:$2 sm:$0xff]
      %s511 = scalar_lea.vmem %s499, 288 [#allocation2]
      %v512 = vld [vmem:[%s511] ss:$2 sm:$0xff]
      %s513 = scalar_lea.vmem %s499, 336 [#allocation2]
      %v514 = vld [vmem:[%s513] ss:$2 sm:$0xff]
      %s515 = scalar_lea.vmem %s499, 1 [#allocation2]
      %v516 = vld [vmem:[%s515] ss:$2 sm:$0xff]
      %s517 = scalar_lea.vmem %s499, 49 [#allocation2]
      %v518 = vld [vmem:[%s517] ss:$2 sm:$0xff]
      %s519 = scalar_lea.vmem %s499, 97 [#allocation2]
      %v520 = vld [vmem:[%s519] ss:$2 sm:$0xff]
      %s521 = scalar_lea.vmem %s499, 145 [#allocation2]
      %v522 = vld [vmem:[%s521] ss:$2 sm:$0xff]
      %s523 = scalar_lea.vmem %s499, 193 [#allocation2]
      %v524 = vld [vmem:[%s523] ss:$2 sm:$0xff]
      %s525 = scalar_lea.vmem %s499, 241 [#allocation2]
      %v526 = vld [vmem:[%s525] ss:$2 sm:$0xff]
      %s527 = scalar_lea.vmem %s499, 289 [#allocation2]
      %v528 = vld [vmem:[%s527] ss:$2 sm:$0xff]
      %s529 = scalar_lea.vmem %s499, 337 [#allocation2]
      %v530 = vld [vmem:[%s529] ss:$2 sm:$0xff]
      %s531 = scalar_lea.vmem %s499, 2 [#allocation2]
      %v532 = vld [vmem:[%s531] ss:$2 sm:$0xff]
      %s533 = scalar_lea.vmem %s499, 50 [#allocation2]
      %v534 = vld [vmem:[%s533] ss:$2 sm:$0xff]
      %s535 = scalar_lea.vmem %s499, 98 [#allocation2]
      %v536 = vld [vmem:[%s535] ss:$2 sm:$0xff]
      %s537 = scalar_lea.vmem %s499, 146 [#allocation2]
      %v538 = vld [vmem:[%s537] ss:$2 sm:$0xff]
      %s539 = scalar_lea.vmem %s499, 194 [#allocation2]
      %v540 = vld [vmem:[%s539] ss:$2 sm:$0xff]
      %s541 = scalar_lea.vmem %s499, 242 [#allocation2]
      %v542 = vld [vmem:[%s541] ss:$2 sm:$0xff]
      %s543 = scalar_lea.vmem %s499, 290 [#allocation2]
      %v544 = vld [vmem:[%s543] ss:$2 sm:$0xff]
      %s545 = scalar_lea.vmem %s499, 338 [#allocation2]
      %v546 = vld [vmem:[%s545] ss:$2 sm:$0xff]
      %555 = vrot.lane.b32.xlu0 %v421, 4
      %v556 = vpop.permute.xlu0 %555
      %557 = vrot.lane.b32.xlu0 %v423, 4
      %v558 = vpop.permute.xlu0 %557
      %559 = vrot.lane.b32.xlu0 %v425, 4
      %v560 = vpop.permute.xlu0 %559
      %561 = vrot.lane.b32.xlu0 %v427, 4
      %v562 = vpop.permute.xlu0 %561
      %563 = vrot.lane.b32.xlu0 %v429, 4
      %v564 = vpop.permute.xlu0 %563
      %565 = vrot.lane.b32.xlu0 %v431, 4
      %v566 = vpop.permute.xlu0 %565
      %567 = vrot.lane.b32.xlu0 %v433, 4
      %v568 = vpop.permute.xlu0 %567
      %569 = vrot.lane.b32.xlu0 %v435, 4
      %v570 = vpop.permute.xlu0 %569
      %587 = vrot.lane.b32.xlu0 %v437, 8
      %v588 = vpop.permute.xlu0 %587
      %589 = vrot.lane.b32.xlu0 %v439, 8
      %v590 = vpop.permute.xlu0 %589
      %591 = vrot.lane.b32.xlu0 %v441, 8
      %v592 = vpop.permute.xlu0 %591
      %593 = vrot.lane.b32.xlu0 %v443, 8
      %v594 = vpop.permute.xlu0 %593
      %595 = vrot.lane.b32.xlu0 %v445, 8
      %v596 = vpop.permute.xlu0 %595
      %597 = vrot.lane.b32.xlu0 %v447, 8
      %v598 = vpop.permute.xlu0 %597
      %599 = vrot.lane.b32.xlu0 %v449, 8
      %v600 = vpop.permute.xlu0 %599
      %601 = vrot.lane.b32.xlu0 %v451, 8
      %v602 = vpop.permute.xlu0 %601
      %619 = vrot.lane.b32.xlu0 %v452, 12
      %v620 = vpop.permute.xlu0 %619
      %621 = vrot.lane.b32.xlu0 %v454, 12
      %v622 = vpop.permute.xlu0 %621
      %623 = vrot.lane.b32.xlu0 %v456, 12
      %v624 = vpop.permute.xlu0 %623
      %625 = vrot.lane.b32.xlu0 %v458, 12
      %v626 = vpop.permute.xlu0 %625
      %627 = vrot.lane.b32.xlu0 %v460, 12
      %v628 = vpop.permute.xlu0 %627
      %629 = vrot.lane.b32.xlu0 %v462, 12
      %v630 = vpop.permute.xlu0 %629
      %631 = vrot.lane.b32.xlu0 %v464, 12
      %v632 = vpop.permute.xlu0 %631
      %633 = vrot.lane.b32.xlu0 %v466, 12
      %v634 = vpop.permute.xlu0 %633
      %651 = vrot.lane.b32.xlu0 %v468, 16
      %v652 = vpop.permute.xlu0 %651
      %653 = vrot.lane.b32.xlu0 %v470, 16
      %v654 = vpop.permute.xlu0 %653
      %655 = vrot.lane.b32.xlu0 %v472, 16
      %v656 = vpop.permute.xlu0 %655
      %657 = vrot.lane.b32.xlu0 %v474, 16
      %v658 = vpop.permute.xlu0 %657
      %659 = vrot.lane.b32.xlu0 %v476, 16
      %v660 = vpop.permute.xlu0 %659
      %661 = vrot.lane.b32.xlu0 %v478, 16
      %v662 = vpop.permute.xlu0 %661
      %663 = vrot.lane.b32.xlu0 %v480, 16
      %v664 = vpop.permute.xlu0 %663
      %665 = vrot.lane.b32.xlu0 %v482, 16
      %v666 = vpop.permute.xlu0 %665
      %683 = vrot.lane.b32.xlu0 %v484, 20
      %v684 = vpop.permute.xlu0 %683
      %685 = vrot.lane.b32.xlu0 %v486, 20
      %v686 = vpop.permute.xlu0 %685
      %687 = vrot.lane.b32.xlu0 %v488, 20
      %v688 = vpop.permute.xlu0 %687
      %689 = vrot.lane.b32.xlu0 %v490, 20
      %v690 = vpop.permute.xlu0 %689
      %691 = vrot.lane.b32.xlu0 %v492, 20
      %v692 = vpop.permute.xlu0 %691
      %693 = vrot.lane.b32.xlu0 %v494, 20
      %v694 = vpop.permute.xlu0 %693
      %695 = vrot.lane.b32.xlu0 %v496, 20
      %v696 = vpop.permute.xlu0 %695
      %697 = vrot.lane.b32.xlu0 %v498, 20
      %v698 = vpop.permute.xlu0 %697
      %715 = vrot.lane.b32.xlu0 %v500, 24
      %v716 = vpop.permute.xlu0 %715
      %717 = vrot.lane.b32.xlu0 %v502, 24
      %v718 = vpop.permute.xlu0 %717
      %719 = vrot.lane.b32.xlu0 %v504, 24
      %v720 = vpop.permute.xlu0 %719
      %721 = vrot.lane.b32.xlu0 %v506, 24
      %v722 = vpop.permute.xlu0 %721
      %723 = vrot.lane.b32.xlu0 %v508, 24
      %v724 = vpop.permute.xlu0 %723
      %725 = vrot.lane.b32.xlu0 %v510, 24
      %v726 = vpop.permute.xlu0 %725
      %727 = vrot.lane.b32.xlu0 %v512, 24
      %v728 = vpop.permute.xlu0 %727
      %729 = vrot.lane.b32.xlu0 %v514, 24
      %v730 = vpop.permute.xlu0 %729
      %747 = vrot.lane.b32.xlu0 %v516, 28
      %v748 = vpop.permute.xlu0 %747
      %749 = vrot.lane.b32.xlu0 %v518, 28
      %v750 = vpop.permute.xlu0 %749
      %751 = vrot.lane.b32.xlu0 %v520, 28
      %v752 = vpop.permute.xlu0 %751
      %753 = vrot.lane.b32.xlu0 %v522, 28
      %v754 = vpop.permute.xlu0 %753
      %755 = vrot.lane.b32.xlu0 %v524, 28
      %v756 = vpop.permute.xlu0 %755
      %757 = vrot.lane.b32.xlu0 %v526, 28
      %v758 = vpop.permute.xlu0 %757
      %759 = vrot.lane.b32.xlu0 %v528, 28
      %v760 = vpop.permute.xlu0 %759
      %761 = vrot.lane.b32.xlu0 %v530, 28
      %v762 = vpop.permute.xlu0 %761
      %779 = vrot.lane.b32.xlu0 %v532, 32
      %v780 = vpop.permute.xlu0 %779
      %781 = vrot.lane.b32.xlu0 %v534, 32
      %v782 = vpop.permute.xlu0 %781
      %783 = vrot.lane.b32.xlu0 %v536, 32
      %v784 = vpop.permute.xlu0 %783
      %785 = vrot.lane.b32.xlu0 %v538, 32
      %v786 = vpop.permute.xlu0 %785
      %787 = vrot.lane.b32.xlu0 %v540, 32
      %v788 = vpop.permute.xlu0 %787
      %789 = vrot.lane.b32.xlu0 %v542, 32
      %v790 = vpop.permute.xlu0 %789
      %791 = vrot.lane.b32.xlu0 %v544, 32
      %v792 = vpop.permute.xlu0 %791
      %793 = vrot.lane.b32.xlu0 %v546, 32
      %v794 = vpop.permute.xlu0 %793
      %v803 = vsel %vm252, %v405, %v556
      %v804 = vsel %vm252, %v407, %v558
      %v805 = vsel %vm252, %v409, %v560
      %v806 = vsel %vm252, %v411, %v562
      %v807 = vsel %vm252, %v413, %v564
      %v808 = vsel %vm252, %v415, %v566
      %v809 = vsel %vm252, %v417, %v568
      %v810 = vsel %vm252, %v419, %v570
      %vm811 = vcmask 64512
      %v812 = vsel %vm811, %v803, %v588
      %v813 = vsel %vm811, %v804, %v590
      %v814 = vsel %vm811, %v805, %v592
      %v815 = vsel %vm811, %v806, %v594
      %v816 = vsel %vm811, %v807, %v596
      %v817 = vsel %vm811, %v808, %v598
      %v818 = vsel %vm811, %v809, %v600
      %v819 = vsel %vm811, %v810, %v602
      %vm820 = vcmask 97280
      %v821 = vsel %vm820, %v812, %v620
      %v822 = vsel %vm820, %v813, %v622
      %v823 = vsel %vm820, %v814, %v624
      %v824 = vsel %vm820, %v815, %v626
      %v825 = vsel %vm820, %v816, %v628
      %v826 = vsel %vm820, %v817, %v630
      %v827 = vsel %vm820, %v818, %v632
      %v828 = vsel %vm820, %v819, %v634
      %vm829 = vcmask 130048
      %v830 = vsel %vm829, %v821, %v652
      %v831 = vsel %vm829, %v822, %v654
      %v832 = vsel %vm829, %v823, %v656
      %v833 = vsel %vm829, %v824, %v658
      %v834 = vsel %vm829, %v825, %v660
      %v835 = vsel %vm829, %v826, %v662
      %v836 = vsel %vm829, %v827, %v664
      %v837 = vsel %vm829, %v828, %v666
      %vm838 = vcmask 162816
      %v839 = vsel %vm838, %v830, %v684
      %v840 = vsel %vm838, %v831, %v686
      %v841 = vsel %vm838, %v832, %v688
      %v842 = vsel %vm838, %v833, %v690
      %v843 = vsel %vm838, %v834, %v692
      %v844 = vsel %vm838, %v835, %v694
      %v845 = vsel %vm838, %v836, %v696
      %v846 = vsel %vm838, %v837, %v698
      %vm847 = vcmask 195584
      %v848 = vsel %vm847, %v839, %v716
      %v849 = vsel %vm847, %v840, %v718
      %v850 = vsel %vm847, %v841, %v720
      %v851 = vsel %vm847, %v842, %v722
      %v852 = vsel %vm847, %v843, %v724
      %v853 = vsel %vm847, %v844, %v726
      %v854 = vsel %vm847, %v845, %v728
      %v855 = vsel %vm847, %v846, %v730
      %vm856 = vcmask 228352
      %v857 = vsel %vm856, %v848, %v748
      %v858 = vsel %vm856, %v849, %v750
      %v859 = vsel %vm856, %v850, %v752
      %v860 = vsel %vm856, %v851, %v754
      %v861 = vsel %vm856, %v852, %v756
      %v862 = vsel %vm856, %v853, %v758
      %v863 = vsel %vm856, %v854, %v760
      %v864 = vsel %vm856, %v855, %v762
      %vm865 = vcmask 261120
      %v866 = vsel %vm865, %v857, %v780
      %v867 = vsel %vm865, %v858, %v782
      %v868 = vsel %vm865, %v859, %v784
      %v869 = vsel %vm865, %v860, %v786
      %v870 = vsel %vm865, %v861, %v788
      %v871 = vsel %vm865, %v862, %v790
      %v872 = vsel %vm865, %v863, %v792
      %v873 = vsel %vm865, %v864, %v794
      %v874 = vld [vmem:[%s1] sm:$0xff]
      %v875 = vld [vmem:[%s1 + $0x8] sm:$0xff]
      %v876 = vld [vmem:[%s1 + $0x10] sm:$0xff]
      %v877 = vld [vmem:[%s1 + $0x18] sm:$0xff]
      %v878 = vld [vmem:[%s1 + $0x20] sm:$0xf]
      %v879 = vld [vmem:[%s2] sm:$0x1]
      %v881 = vlaneseq
      %v882 = vshrl.u32 %v881, 7
      %v883 = vsub.s32 0, %v882
      %v884 = vrot.slane %v879, %v883
      %vm886 = vcmask 293888
      %v888 = vsel %vm886, %v866, 0
      %v891 = vsel %vm886, %v867, 0
      %v894 = vsel %vm886, %v868, 0
      %v897 = vsel %vm886, %v869, 0
      %v900 = vsel %vm886, %v870, 0
      %v903 = vsel %vm886, %v871, 0
      %v906 = vsel %vm886, %v872, 0
      %v909 = vsel %vm886, %v873, 0
      %vm911 = vcmask 1043456
      %v913 = vsel %vm911, %v878, 0
      %915 = vmatprep.subr.mxu0 0.0
      %916 = vmatpush1.msra.mxu0 %v874
      %917 = vmatprep.subr.mxu0 0.0
      %918 = vmatpush1.msra.mxu0 %v875
      %919 = vmatprep.subr.mxu0 0.0
      %920 = vmatpush1.msra.mxu0 %v876
      %921 = vmatprep.subr.mxu0 0.0
      %922 = vmatpush1.msra.mxu0 %v877
      %923 = vmatprep.subr.mxu0 0.0
      %924 = vmatpush1.msra.mxu0 %v913
      %925 = vmatprep.subr.mxu0 0.0
      %926 = vmatpush1.msra.mxu0 0.0
      %927 = vmatprep.subr.mxu0 0.0
      %928 = vmatpush1.msra.mxu0 0.0
      %929 = vmatprep.subr.mxu0 0.0
      %930 = vmatpush1.msra.mxu0 0.0
      %931 = vmatprep.subr.mxu0 0.0
      %932 = vmatpush1.msra.mxu0 0.0
      %933 = vmatprep.subr.mxu0 0.0
      %934 = vmatpush1.msra.mxu0 0.0
      %935 = vmatprep.subr.mxu0 0.0
      %936 = vmatpush1.msra.mxu0 0.0
      %937 = vmatprep.subr.mxu0 0.0
      %938 = vmatpush1.msra.mxu0 0.0
      %939 = vmatprep.subr.mxu0 0.0
      %940 = vmatpush1.msra.mxu0 0.0
      %941 = vmatprep.subr.mxu0 0.0
      %942 = vmatpush1.msra.mxu0 0.0
      %943 = vmatprep.subr.mxu0 0.0
      %944 = vmatpush1.msra.mxu0 0.0
      %945 = vmatprep.subr.mxu0 0.0
      %946 = vmatpush1.msra.mxu0 0.0
      %947 = vmatprep.subr.mxu0 0.0
      %948 = vmatpush1.msra.mxu0 0.0
      %949 = vmatprep.subr.mxu0 0.0
      %950 = vmatpush1.msra.mxu0 0.0
      %951 = vmatprep.subr.mxu0 0.0
      %952 = vmatpush1.msra.mxu0 0.0
      %953 = vmatprep.subr.mxu0 0.0
      %954 = vmatpush1.msra.mxu0 0.0
      %955 = vmatprep.subr.mxu0 0.0
      %956 = vmatpush1.msra.mxu0 0.0
      %957 = vmatprep.subr.mxu0 0.0
      %958 = vmatpush1.msra.mxu0 0.0
      %959 = vmatprep.subr.mxu0 0.0
      %960 = vmatpush1.msra.mxu0 0.0
      %961 = vmatprep.subr.mxu0 0.0
      %962 = vmatpush1.msra.mxu0 0.0
      %963 = vmatprep.subr.mxu0 0.0
      %964 = vmatpush1.msra.mxu0 0.0
      %965 = vmatprep.subr.mxu0 0.0
      %966 = vmatpush1.msra.mxu0 0.0
      %967 = vmatprep.subr.mxu0 0.0
      %968 = vmatpush1.msra.mxu0 0.0
      %969 = vmatprep.subr.mxu0 0.0
      %970 = vmatpush1.msra.mxu0 0.0
      %971 = vmatprep.subr.mxu0 0.0
      %972 = vmatpush1.msra.mxu0 0.0
      %973 = vmatprep.subr.mxu0 0.0
      %974 = vmatpush1.msra.mxu0 0.0
      %975 = vmatprep.subr.mxu0 0.0
      %976 = vmatpush1.msra.mxu0 0.0
      %977 = vmatprep.subr.mxu0 0.0
      %978 = vmatpush1.msra.mxu0 0.0
      %979 = vmatprep.mubr.f32.mxu0 0.0
      %980 = vmatmul.mubr.f32.gmra.mrb[0].mxu0 %v888
      %v981 = vpop.f32.mrb[0].mxu0
      %v982 = vadd.f32 %v884, %v981
      %v983 = vpop.f32.mrb[0].mxu0
      %984 = vmatprep.mubr.f32.mxu0 0.0
      %985 = vmatmul.mubr.f32.gmra.mrb[0].mxu0 %v891
      %v986 = vpop.f32.mrb[0].mxu0
      %v987 = vadd.f32 %v884, %v986
      %v988 = vpop.f32.mrb[0].mxu0
      %989 = vmatprep.mubr.f32.mxu0 0.0
      %990 = vmatmul.mubr.f32.gmra.mrb[0].mxu0 %v894
      %v991 = vpop.f32.mrb[0].mxu0
      %v992 = vadd.f32 %v884, %v991
      %v993 = vpop.f32.mrb[0].mxu0
      %994 = vmatprep.mubr.f32.mxu0 0.0
      %995 = vmatmul.mubr.f32.gmra.mrb[0].mxu0 %v897
      %v996 = vpop.f32.mrb[0].mxu0
      %v997 = vadd.f32 %v884, %v996
      %v998 = vpop.f32.mrb[0].mxu0
      %999 = vmatprep.mubr.f32.mxu0 0.0
      %1000 = vmatmul.mubr.f32.gmra.mrb[0].mxu0 %v900
      %v1001 = vpop.f32.mrb[0].mxu0
      %v1002 = vadd.f32 %v884, %v1001
      %v1003 = vpop.f32.mrb[0].mxu0
      %1004 = vmatprep.mubr.f32.mxu0 0.0
      %1005 = vmatmul.mubr.f32.gmra.mrb[0].mxu0 %v903
      %v1006 = vpop.f32.mrb[0].mxu0
      %v1007 = vadd.f32 %v884, %v1006
      %v1008 = vpop.f32.mrb[0].mxu0
      %1009 = vmatprep.mubr.f32.mxu0 0.0
      %1010 = vmatmul.mubr.f32.gmra.mrb[0].mxu0 %v906
      %v1011 = vpop.f32.mrb[0].mxu0
      %v1012 = vadd.f32 %v884, %v1011
      %v1013 = vpop.f32.mrb[0].mxu0
      %1014 = vmatprep.mubr.f32.mxu0 0.0
      %1015 = vmatmul.mubr.f32.gmra.mrb[0].mxu0 %v909
      %v1016 = vpop.f32.mrb[0].mxu0
      %v1017 = vadd.f32 %v884, %v1016
      %v1018 = vpop.f32.mrb[0].mxu0
      %1019 = vdwg.mxu0
      %1020 = vst.msk [vmem:[#allocation3] sm:$0xff] %vm811, 0.0
      %vm1021 = vcmask 58368
      %1022 = vst.msk [vmem:[#allocation3 + $0x8] sm:$0x3] %vm1021, 0.0
      %1023 = vst.msk [vmem:[#allocation3 + $0x10] sm:$0xff] %vm811, 0.0
      %1024 = vst.msk [vmem:[#allocation3 + $0x18] sm:$0x3] %vm1021, 0.0
      %1025 = vst.msk [vmem:[#allocation3 + $0x20] sm:$0xff] %vm811, 0.0
      %1026 = vst.msk [vmem:[#allocation3 + $0x28] sm:$0x3] %vm1021, 0.0
      %1027 = vst.msk [vmem:[#allocation3 + $0x30] sm:$0xff] %vm811, 0.0
      %1028 = vst.msk [vmem:[#allocation3 + $0x38] sm:$0x3] %vm1021, 0.0
      %1029 = vst.msk [vmem:[#allocation3 + $0x40] sm:$0xff] %vm811, 0.0
      %1030 = vst.msk [vmem:[#allocation3 + $0x48] sm:$0x3] %vm1021, 0.0
      %1031 = vst.msk [vmem:[#allocation3 + $0x50] sm:$0xff] %vm811, 0.0
      %1032 = vst.msk [vmem:[#allocation3 + $0x58] sm:$0x3] %vm1021, 0.0
      %1033 = vst.msk [vmem:[#allocation3 + $0x60] sm:$0xff] %vm811, 0.0
      %1034 = vst.msk [vmem:[#allocation3 + $0x68] sm:$0x3] %vm1021, 0.0
      %1035 = vst.msk [vmem:[#allocation3 + $0x70] sm:$0xff] %vm811, 0.0
      %1036 = vst.msk [vmem:[#allocation3 + $0x78] sm:$0x3] %vm1021, 0.0
      %1037 = vst.msk [vmem:[#allocation3 + $0x80] sm:$0xff] %vm811, 0.0
      %1038 = vst.msk [vmem:[#allocation3 + $0x88] sm:$0x3] %vm1021, 0.0
      %1039 = vst.msk [vmem:[#allocation3 + $0x90] sm:$0xff] %vm811, 0.0
      %1040 = vst.msk [vmem:[#allocation3 + $0x98] sm:$0x3] %vm1021, 0.0
      %v1041 = vmax.f32 %v982, 0.0
      %v1042 = vmax.f32 %v987, 0.0
      %v1043 = vmax.f32 %v992, 0.0
      %v1044 = vmax.f32 %v997, 0.0
      %v1045 = vmax.f32 %v1002, 0.0
      %v1046 = vmax.f32 %v1007, 0.0
      %v1047 = vmax.f32 %v1012, 0.0
      %v1048 = vmax.f32 %v1017, 0.0
      %s1049 = scalar_lea.vmem [#allocation3], 16
      %1050 = vst.msk [vmem:[%s1049 + $0x1] sm:$0xff] %vm811, %v1041
      %1051 = vst.msk [vmem:[%s1049 + $0x11] sm:$0xff] %vm811, %v1042
      %1052 = vst.msk [vmem:[%s1049 + $0x21] sm:$0xff] %vm811, %v1043
      %1053 = vst.msk [vmem:[%s1049 + $0x31] sm:$0xff] %vm811, %v1044
      %1054 = vst.msk [vmem:[%s1049 + $0x41] sm:$0xff] %vm811, %v1045
      %1055 = vst.msk [vmem:[%s1049 + $0x51] sm:$0xff] %vm811, %v1046
      %1056 = vst.msk [vmem:[%s1049 + $0x61] sm:$0xff] %vm811, %v1047
      %1057 = vst.msk [vmem:[%s1049 + $0x71] sm:$0xff] %vm811, %v1048
      %v1058 = vld [vmem:[#allocation3] sm:$0xff]
      %v1059 = vld [vmem:[#allocation3 + $0x10] sm:$0xff]
      %v1060 = vld [vmem:[#allocation3 + $0x20] sm:$0xff]
      %v1061 = vld [vmem:[#allocation3 + $0x30] sm:$0xff]
      %v1062 = vld [vmem:[#allocation3 + $0x40] sm:$0xff]
      %v1063 = vld [vmem:[#allocation3 + $0x50] sm:$0xff]
      %v1064 = vld [vmem:[#allocation3 + $0x60] sm:$0xff]
      %v1065 = vld [vmem:[#allocation3 + $0x70] sm:$0xff]
      %v1066 = vld [vmem:[#allocation3 + $0x1] sm:$0xff]
      %v1067 = vld [vmem:[#allocation3 + $0x11] sm:$0xff]
      %v1068 = vld [vmem:[#allocation3 + $0x21] sm:$0xff]
      %v1069 = vld [vmem:[#allocation3 + $0x31] sm:$0xff]
      %v1070 = vld [vmem:[#allocation3 + $0x41] sm:$0xff]
      %v1071 = vld [vmem:[#allocation3 + $0x51] sm:$0xff]
      %v1072 = vld [vmem:[#allocation3 + $0x61] sm:$0xff]
      %v1073 = vld [vmem:[#allocation3 + $0x71] sm:$0xff]
      %v1074 = vld [vmem:[#allocation3 + $0x2] sm:$0xff]
      %v1075 = vld [vmem:[#allocation3 + $0x12] sm:$0xff]
      %v1076 = vld [vmem:[#allocation3 + $0x22] sm:$0xff]
      %v1077 = vld [vmem:[#allocation3 + $0x32] sm:$0xff]
      %v1078 = vld [vmem:[#allocation3 + $0x42] sm:$0xff]
      %v1079 = vld [vmem:[#allocation3 + $0x52] sm:$0xff]
      %v1080 = vld [vmem:[#allocation3 + $0x62] sm:$0xff]
      %v1081 = vld [vmem:[#allocation3 + $0x72] sm:$0xff]
      %v1082 = vld [vmem:[%s1049] sm:$0xff]
      %v1083 = vld [vmem:[%s1049 + $0x10] sm:$0xff]
      %v1084 = vld [vmem:[%s1049 + $0x20] sm:$0xff]
      %v1085 = vld [vmem:[%s1049 + $0x30] sm:$0xff]
      %v1086 = vld [vmem:[%s1049 + $0x40] sm:$0xff]
      %v1087 = vld [vmem:[%s1049 + $0x50] sm:$0xff]
      %v1088 = vld [vmem:[%s1049 + $0x60] sm:$0xff]
      %v1089 = vld [vmem:[%s1049 + $0x70] sm:$0xff]
      %v1090 = vld [vmem:[%s1049 + $0x1] sm:$0xff]
      %v1091 = vld [vmem:[%s1049 + $0x11] sm:$0xff]
      %v1092 = vld [vmem:[%s1049 + $0x21] sm:$0xff]
      %v1093 = vld [vmem:[%s1049 + $0x31] sm:$0xff]
      %v1094 = vld [vmem:[%s1049 + $0x41] sm:$0xff]
      %v1095 = vld [vmem:[%s1049 + $0x51] sm:$0xff]
      %v1096 = vld [vmem:[%s1049 + $0x61] sm:$0xff]
      %v1097 = vld [vmem:[%s1049 + $0x71] sm:$0xff]
      %v1098 = vld [vmem:[%s1049 + $0x2] sm:$0xff]
      %v1099 = vld [vmem:[%s1049 + $0x12] sm:$0xff]
      %v1100 = vld [vmem:[%s1049 + $0x22] sm:$0xff]
      %v1101 = vld [vmem:[%s1049 + $0x32] sm:$0xff]
      %v1102 = vld [vmem:[%s1049 + $0x42] sm:$0xff]
      %v1103 = vld [vmem:[%s1049 + $0x52] sm:$0xff]
      %v1104 = vld [vmem:[%s1049 + $0x62] sm:$0xff]
      %v1105 = vld [vmem:[%s1049 + $0x72] sm:$0xff]
      %s1106 = scalar_lea.vmem [#allocation3], 32
      %v1107 = vld [vmem:[%s1106] sm:$0xff]
      %v1108 = vld [vmem:[%s1106 + $0x10] sm:$0xff]
      %v1109 = vld [vmem:[%s1106 + $0x20] sm:$0xff]
      %v1110 = vld [vmem:[%s1106 + $0x30] sm:$0xff]
      %v1111 = vld [vmem:[%s1106 + $0x40] sm:$0xff]
      %v1112 = vld [vmem:[%s1106 + $0x50] sm:$0xff]
      %v1113 = vld [vmem:[%s1106 + $0x60] sm:$0xff]
      %v1114 = vld [vmem:[%s1106 + $0x70] sm:$0xff]
      %v1115 = vld [vmem:[%s1106 + $0x1] sm:$0xff]
      %v1116 = vld [vmem:[%s1106 + $0x11] sm:$0xff]
      %v1117 = vld [vmem:[%s1106 + $0x21] sm:$0xff]
      %v1118 = vld [vmem:[%s1106 + $0x31] sm:$0xff]
      %v1119 = vld [vmem:[%s1106 + $0x41] sm:$0xff]
      %v1120 = vld [vmem:[%s1106 + $0x51] sm:$0xff]
      %v1121 = vld [vmem:[%s1106 + $0x61] sm:$0xff]
      %v1122 = vld [vmem:[%s1106 + $0x71] sm:$0xff]
      %v1123 = vld [vmem:[%s1106 + $0x2] sm:$0xff]
      %v1124 = vld [vmem:[%s1106 + $0x12] sm:$0xff]
      %v1125 = vld [vmem:[%s1106 + $0x22] sm:$0xff]
      %v1126 = vld [vmem:[%s1106 + $0x32] sm:$0xff]
      %v1127 = vld [vmem:[%s1106 + $0x42] sm:$0xff]
      %v1128 = vld [vmem:[%s1106 + $0x52] sm:$0xff]
      %v1129 = vld [vmem:[%s1106 + $0x62] sm:$0xff]
      %v1130 = vld [vmem:[%s1106 + $0x72] sm:$0xff]
      %1139 = vrot.lane.b32.xlu0 %v1066, 8
      %v1140 = vpop.permute.xlu0 %1139
      %1141 = vrot.lane.b32.xlu0 %v1067, 8
      %v1142 = vpop.permute.xlu0 %1141
      %1143 = vrot.lane.b32.xlu0 %v1068, 8
      %v1144 = vpop.permute.xlu0 %1143
      %1145 = vrot.lane.b32.xlu0 %v1069, 8
      %v1146 = vpop.permute.xlu0 %1145
      %1147 = vrot.lane.b32.xlu0 %v1070, 8
      %v1148 = vpop.permute.xlu0 %1147
      %1149 = vrot.lane.b32.xlu0 %v1071, 8
      %v1150 = vpop.permute.xlu0 %1149
      %1151 = vrot.lane.b32.xlu0 %v1072, 8
      %v1152 = vpop.permute.xlu0 %1151
      %1153 = vrot.lane.b32.xlu0 %v1073, 8
      %v1154 = vpop.permute.xlu0 %1153
      %1171 = vrot.lane.b32.xlu0 %v1074, 16
      %v1172 = vpop.permute.xlu0 %1171
      %1173 = vrot.lane.b32.xlu0 %v1075, 16
      %v1174 = vpop.permute.xlu0 %1173
      %1175 = vrot.lane.b32.xlu0 %v1076, 16
      %v1176 = vpop.permute.xlu0 %1175
      %1177 = vrot.lane.b32.xlu0 %v1077, 16
      %v1178 = vpop.permute.xlu0 %1177
      %1179 = vrot.lane.b32.xlu0 %v1078, 16
      %v1180 = vpop.permute.xlu0 %1179
      %1181 = vrot.lane.b32.xlu0 %v1079, 16
      %v1182 = vpop.permute.xlu0 %1181
      %1183 = vrot.lane.b32.xlu0 %v1080, 16
      %v1184 = vpop.permute.xlu0 %1183
      %1185 = vrot.lane.b32.xlu0 %v1081, 16
      %v1186 = vpop.permute.xlu0 %1185
      %1203 = vrot.lane.b32.xlu0 %v1082, 24
      %v1204 = vpop.permute.xlu0 %1203
      %1205 = vrot.lane.b32.xlu0 %v1083, 24
      %v1206 = vpop.permute.xlu0 %1205
      %1207 = vrot.lane.b32.xlu0 %v1084, 24
      %v1208 = vpop.permute.xlu0 %1207
      %1209 = vrot.lane.b32.xlu0 %v1085, 24
      %v1210 = vpop.permute.xlu0 %1209
      %1211 = vrot.lane.b32.xlu0 %v1086, 24
      %v1212 = vpop.permute.xlu0 %1211
      %1213 = vrot.lane.b32.xlu0 %v1087, 24
      %v1214 = vpop.permute.xlu0 %1213
      %1215 = vrot.lane.b32.xlu0 %v1088, 24
      %v1216 = vpop.permute.xlu0 %1215
      %1217 = vrot.lane.b32.xlu0 %v1089, 24
      %v1218 = vpop.permute.xlu0 %1217
      %1235 = vrot.lane.b32.xlu0 %v1090, 32
      %v1236 = vpop.permute.xlu0 %1235
      %1237 = vrot.lane.b32.xlu0 %v1091, 32
      %v1238 = vpop.permute.xlu0 %1237
      %1239 = vrot.lane.b32.xlu0 %v1092, 32
      %v1240 = vpop.permute.xlu0 %1239
      %1241 = vrot.lane.b32.xlu0 %v1093, 32
      %v1242 = vpop.permute.xlu0 %1241
      %1243 = vrot.lane.b32.xlu0 %v1094, 32
      %v1244 = vpop.permute.xlu0 %1243
      %1245 = vrot.lane.b32.xlu0 %v1095, 32
      %v1246 = vpop.permute.xlu0 %1245
      %1247 = vrot.lane.b32.xlu0 %v1096, 32
      %v1248 = vpop.permute.xlu0 %1247
      %1249 = vrot.lane.b32.xlu0 %v1097, 32
      %v1250 = vpop.permute.xlu0 %1249
      %1267 = vrot.lane.b32.xlu0 %v1098, 40
      %v1268 = vpop.permute.xlu0 %1267
      %1269 = vrot.lane.b32.xlu0 %v1099, 40
      %v1270 = vpop.permute.xlu0 %1269
      %1271 = vrot.lane.b32.xlu0 %v1100, 40
      %v1272 = vpop.permute.xlu0 %1271
      %1273 = vrot.lane.b32.xlu0 %v1101, 40
      %v1274 = vpop.permute.xlu0 %1273
      %1275 = vrot.lane.b32.xlu0 %v1102, 40
      %v1276 = vpop.permute.xlu0 %1275
      %1277 = vrot.lane.b32.xlu0 %v1103, 40
      %v1278 = vpop.permute.xlu0 %1277
      %1279 = vrot.lane.b32.xlu0 %v1104, 40
      %v1280 = vpop.permute.xlu0 %1279
      %1281 = vrot.lane.b32.xlu0 %v1105, 40
      %v1282 = vpop.permute.xlu0 %1281
      %1299 = vrot.lane.b32.xlu0 %v1107, 48
      %v1300 = vpop.permute.xlu0 %1299
      %1301 = vrot.lane.b32.xlu0 %v1108, 48
      %v1302 = vpop.permute.xlu0 %1301
      %1303 = vrot.lane.b32.xlu0 %v1109, 48
      %v1304 = vpop.permute.xlu0 %1303
      %1305 = vrot.lane.b32.xlu0 %v1110, 48
      %v1306 = vpop.permute.xlu0 %1305
      %1307 = vrot.lane.b32.xlu0 %v1111, 48
      %v1308 = vpop.permute.xlu0 %1307
      %1309 = vrot.lane.b32.xlu0 %v1112, 48
      %v1310 = vpop.permute.xlu0 %1309
      %1311 = vrot.lane.b32.xlu0 %v1113, 48
      %v1312 = vpop.permute.xlu0 %1311
      %1313 = vrot.lane.b32.xlu0 %v1114, 48
      %v1314 = vpop.permute.xlu0 %1313
      %1331 = vrot.lane.b32.xlu0 %v1115, 56
      %v1332 = vpop.permute.xlu0 %1331
      %1333 = vrot.lane.b32.xlu0 %v1116, 56
      %v1334 = vpop.permute.xlu0 %1333
      %1335 = vrot.lane.b32.xlu0 %v1117, 56
      %v1336 = vpop.permute.xlu0 %1335
      %1337 = vrot.lane.b32.xlu0 %v1118, 56
      %v1338 = vpop.permute.xlu0 %1337
      %1339 = vrot.lane.b32.xlu0 %v1119, 56
      %v1340 = vpop.permute.xlu0 %1339
      %1341 = vrot.lane.b32.xlu0 %v1120, 56
      %v1342 = vpop.permute.xlu0 %1341
      %1343 = vrot.lane.b32.xlu0 %v1121, 56
      %v1344 = vpop.permute.xlu0 %1343
      %1345 = vrot.lane.b32.xlu0 %v1122, 56
      %v1346 = vpop.permute.xlu0 %1345
      %1363 = vrot.lane.b32.xlu0 %v1123, 64
      %v1364 = vpop.permute.xlu0 %1363
      %1365 = vrot.lane.b32.xlu0 %v1124, 64
      %v1366 = vpop.permute.xlu0 %1365
      %1367 = vrot.lane.b32.xlu0 %v1125, 64
      %v1368 = vpop.permute.xlu0 %1367
      %1369 = vrot.lane.b32.xlu0 %v1126, 64
      %v1370 = vpop.permute.xlu0 %1369
      %1371 = vrot.lane.b32.xlu0 %v1127, 64
      %v1372 = vpop.permute.xlu0 %1371
      %1373 = vrot.lane.b32.xlu0 %v1128, 64
      %v1374 = vpop.permute.xlu0 %1373
      %1375 = vrot.lane.b32.xlu0 %v1129, 64
      %v1376 = vpop.permute.xlu0 %1375
      %1377 = vrot.lane.b32.xlu0 %v1130, 64
      %v1378 = vpop.permute.xlu0 %1377
      %v1387 = vsel %vm811, %v1058, %v1140
      %v1388 = vsel %vm811, %v1059, %v1142
      %v1389 = vsel %vm811, %v1060, %v1144
      %v1390 = vsel %vm811, %v1061, %v1146
      %v1391 = vsel %vm811, %v1062, %v1148
      %v1392 = vsel %vm811, %v1063, %v1150
      %v1393 = vsel %vm811, %v1064, %v1152
      %v1394 = vsel %vm811, %v1065, %v1154
      %v1395 = vsel %vm829, %v1387, %v1172
      %v1396 = vsel %vm829, %v1388, %v1174
      %v1397 = vsel %vm829, %v1389, %v1176
      %v1398 = vsel %vm829, %v1390, %v1178
      %v1399 = vsel %vm829, %v1391, %v1180
      %v1400 = vsel %vm829, %v1392, %v1182
      %v1401 = vsel %vm829, %v1393, %v1184
      %v1402 = vsel %vm829, %v1394, %v1186
      %v1403 = vsel %vm847, %v1395, %v1204
      %v1404 = vsel %vm847, %v1396, %v1206
      %v1405 = vsel %vm847, %v1397, %v1208
      %v1406 = vsel %vm847, %v1398, %v1210
      %v1407 = vsel %vm847, %v1399, %v1212
      %v1408 = vsel %vm847, %v1400, %v1214
      %v1409 = vsel %vm847, %v1401, %v1216
      %v1410 = vsel %vm847, %v1402, %v1218
      %v1411 = vsel %vm865, %v1403, %v1236
      %v1412 = vsel %vm865, %v1404, %v1238
      %v1413 = vsel %vm865, %v1405, %v1240
      %v1414 = vsel %vm865, %v1406, %v1242
      %v1415 = vsel %vm865, %v1407, %v1244
      %v1416 = vsel %vm865, %v1408, %v1246
      %v1417 = vsel %vm865, %v1409, %v1248
      %v1418 = vsel %vm865, %v1410, %v1250
      %vm1419 = vcmask 326656
      %v1420 = vsel %vm1419, %v1411, %v1268
      %v1421 = vsel %vm1419, %v1412, %v1270
      %v1422 = vsel %vm1419, %v1413, %v1272
      %v1423 = vsel %vm1419, %v1414, %v1274
      %v1424 = vsel %vm1419, %v1415, %v1276
      %v1425 = vsel %vm1419, %v1416, %v1278
      %v1426 = vsel %vm1419, %v1417, %v1280
      %v1427 = vsel %vm1419, %v1418, %v1282
      %vm1428 = vcmask 392192
      %v1429 = vsel %vm1428, %v1420, %v1300
      %v1430 = vsel %vm1428, %v1421, %v1302
      %v1431 = vsel %vm1428, %v1422, %v1304
      %v1432 = vsel %vm1428, %v1423, %v1306
      %v1433 = vsel %vm1428, %v1424, %v1308
      %v1434 = vsel %vm1428, %v1425, %v1310
      %v1435 = vsel %vm1428, %v1426, %v1312
      %v1436 = vsel %vm1428, %v1427, %v1314
      %vm1437 = vcmask 457728
      %v1438 = vsel %vm1437, %v1429, %v1332
      %v1439 = vsel %vm1437, %v1430, %v1334
      %v1440 = vsel %vm1437, %v1431, %v1336
      %v1441 = vsel %vm1437, %v1432, %v1338
      %v1442 = vsel %vm1437, %v1433, %v1340
      %v1443 = vsel %vm1437, %v1434, %v1342
      %v1444 = vsel %vm1437, %v1435, %v1344
      %v1445 = vsel %vm1437, %v1436, %v1346
      %vm1446 = vcmask 523264
      %v1447 = vsel %vm1446, %v1438, %v1364
      %v1448 = vsel %vm1446, %v1439, %v1366
      %v1449 = vsel %vm1446, %v1440, %v1368
      %v1450 = vsel %vm1446, %v1441, %v1370
      %v1451 = vsel %vm1446, %v1442, %v1372
      %v1452 = vsel %vm1446, %v1443, %v1374
      %v1453 = vsel %vm1446, %v1444, %v1376
      %v1454 = vsel %vm1446, %v1445, %v1378
      %v1455 = vld [vmem:[%s3] sm:$0xff]
      %v1456 = vld [vmem:[%s3 + $0x8] sm:$0xff]
      %v1457 = vld [vmem:[%s3 + $0x10] sm:$0xff]
      %v1458 = vld [vmem:[%s3 + $0x18] sm:$0xff]
      %v1459 = vld [vmem:[%s3 + $0x20] sm:$0xff]
      %v1460 = vld [vmem:[%s3 + $0x28] sm:$0xff]
      %v1461 = vld [vmem:[%s3 + $0x30] sm:$0xff]
      %v1462 = vld [vmem:[%s3 + $0x38] sm:$0xff]
      %v1463 = vld [vmem:[%s3 + $0x40] sm:$0xff]
      %v1464 = vld [vmem:[%s4] sm:$0x1]
      %v1466 = vlaneseq
      %v1467 = vshrl.u32 %v1466, 7
      %v1468 = vsub.s32 0, %v1467
      %v1469 = vrot.slane %v1464, %v1468
      %vm1471 = vcmask 588800
      %v1473 = vsel %vm1471, %v1447, 0
      %v1476 = vsel %vm1471, %v1448, 0
      %v1479 = vsel %vm1471, %v1449, 0
      %v1482 = vsel %vm1471, %v1450, 0
      %v1485 = vsel %vm1471, %v1451, 0
      %v1488 = vsel %vm1471, %v1452, 0
      %v1491 = vsel %vm1471, %v1453, 0
      %v1494 = vsel %vm1471, %v1454, 0
      %1496 = vmatprep.subr.mxu0 0.0
      %1497 = vmatpush1.msra.mxu0 %v1455
      %1498 = vmatprep.subr.mxu0 0.0
      %1499 = vmatpush1.msra.mxu0 %v1456
      %1500 = vmatprep.subr.mxu0 0.0
      %1501 = vmatpush1.msra.mxu0 %v1457
      %1502 = vmatprep.subr.mxu0 0.0
      %1503 = vmatpush1.msra.mxu0 %v1458
      %1504 = vmatprep.subr.mxu0 0.0
      %1505 = vmatpush1.msra.mxu0 %v1459
      %1506 = vmatprep.subr.mxu0 0.0
      %1507 = vmatpush1.msra.mxu0 %v1460
      %1508 = vmatprep.subr.mxu0 0.0
      %1509 = vmatpush1.msra.mxu0 %v1461
      %1510 = vmatprep.subr.mxu0 0.0
      %1511 = vmatpush1.msra.mxu0 %v1462
      %1512 = vmatprep.subr.mxu0 0.0
      %1513 = vmatpush1.msra.mxu0 %v1463
      %1514 = vmatprep.subr.mxu0 0.0
      %1515 = vmatpush1.msra.mxu0 0.0
      %1516 = vmatprep.subr.mxu0 0.0
      %1517 = vmatpush1.msra.mxu0 0.0
      %1518 = vmatprep.subr.mxu0 0.0
      %1519 = vmatpush1.msra.mxu0 0.0
      %1520 = vmatprep.subr.mxu0 0.0
      %1521 = vmatpush1.msra.mxu0 0.0
      %1522 = vmatprep.subr.mxu0 0.0
      %1523 = vmatpush1.msra.mxu0 0.0
      %1524 = vmatprep.subr.mxu0 0.0
      %1525 = vmatpush1.msra.mxu0 0.0
      %1526 = vmatprep.subr.mxu0 0.0
      %1527 = vmatpush1.msra.mxu0 0.0
      %1528 = vmatprep.subr.mxu0 0.0
      %1529 = vmatpush1.msra.mxu0 0.0
      %1530 = vmatprep.subr.mxu0 0.0
      %1531 = vmatpush1.msra.mxu0 0.0
      %1532 = vmatprep.subr.mxu0 0.0
      %1533 = vmatpush1.msra.mxu0 0.0
      %1534 = vmatprep.subr.mxu0 0.0
      %1535 = vmatpush1.msra.mxu0 0.0
      %1536 = vmatprep.subr.mxu0 0.0
      %1537 = vmatpush1.msra.mxu0 0.0
      %1538 = vmatprep.subr.mxu0 0.0
      %1539 = vmatpush1.msra.mxu0 0.0
      %1540 = vmatprep.subr.mxu0 0.0
      %1541 = vmatpush1.msra.mxu0 0.0
      %1542 = vmatprep.subr.mxu0 0.0
      %1543 = vmatpush1.msra.mxu0 0.0
      %1544 = vmatprep.subr.mxu0 0.0
      %1545 = vmatpush1.msra.mxu0 0.0
      %1546 = vmatprep.subr.mxu0 0.0
      %1547 = vmatpush1.msra.mxu0 0.0
      %1548 = vmatprep.subr.mxu0 0.0
      %1549 = vmatpush1.msra.mxu0 0.0
      %1550 = vmatprep.subr.mxu0 0.0
      %1551 = vmatpush1.msra.mxu0 0.0
      %1552 = vmatprep.subr.mxu0 0.0
      %1553 = vmatpush1.msra.mxu0 0.0
      %1554 = vmatprep.subr.mxu0 0.0
      %1555 = vmatpush1.msra.mxu0 0.0
      %1556 = vmatprep.subr.mxu0 0.0
      %1557 = vmatpush1.msra.mxu0 0.0
      %1558 = vmatprep.subr.mxu0 0.0
      %1559 = vmatpush1.msra.mxu0 0.0
      %1560 = vmatprep.mubr.f32.mxu0 0.0
      %1561 = vmatmul.mubr.f32.gmra.mrb[0].mxu0 %v1473
      %v1562 = vpop.f32.mrb[0].mxu0
      %v1563 = vadd.f32 %v1469, %v1562
      %v1564 = vpop.f32.mrb[0].mxu0
      %1565 = vmatprep.mubr.f32.mxu0 0.0
      %1566 = vmatmul.mubr.f32.gmra.mrb[0].mxu0 %v1476
      %v1567 = vpop.f32.mrb[0].mxu0
      %v1568 = vadd.f32 %v1469, %v1567
      %v1569 = vpop.f32.mrb[0].mxu0
      %1570 = vmatprep.mubr.f32.mxu0 0.0
      %1571 = vmatmul.mubr.f32.gmra.mrb[0].mxu0 %v1479
      %v1572 = vpop.f32.mrb[0].mxu0
      %v1573 = vadd.f32 %v1469, %v1572
      %v1574 = vpop.f32.mrb[0].mxu0
      %1575 = vmatprep.mubr.f32.mxu0 0.0
      %1576 = vmatmul.mubr.f32.gmra.mrb[0].mxu0 %v1482
      %v1577 = vpop.f32.mrb[0].mxu0
      %v1578 = vadd.f32 %v1469, %v1577
      %v1579 = vpop.f32.mrb[0].mxu0
      %1580 = vmatprep.mubr.f32.mxu0 0.0
      %1581 = vmatmul.mubr.f32.gmra.mrb[0].mxu0 %v1485
      %v1582 = vpop.f32.mrb[0].mxu0
      %v1583 = vadd.f32 %v1469, %v1582
      %v1584 = vpop.f32.mrb[0].mxu0
      %1585 = vmatprep.mubr.f32.mxu0 0.0
      %1586 = vmatmul.mubr.f32.gmra.mrb[0].mxu0 %v1488
      %v1587 = vpop.f32.mrb[0].mxu0
      %v1588 = vadd.f32 %v1469, %v1587
      %v1589 = vpop.f32.mrb[0].mxu0
      %1590 = vmatprep.mubr.f32.mxu0 0.0
      %1591 = vmatmul.mubr.f32.gmra.mrb[0].mxu0 %v1491
      %v1592 = vpop.f32.mrb[0].mxu0
      %v1593 = vadd.f32 %v1469, %v1592
      %v1594 = vpop.f32.mrb[0].mxu0
      %1595 = vmatprep.mubr.f32.mxu0 0.0
      %1596 = vmatmul.mubr.f32.gmra.mrb[0].mxu0 %v1494
      %v1597 = vpop.f32.mrb[0].mxu0
      %v1598 = vadd.f32 %v1469, %v1597
      %v1599 = vpop.f32.mrb[0].mxu0
      %1600 = vdwg.mxu0
      %v1601 = vld [vmem:[%s246] ss:$2 sm:$0xff]
      %s1602 = scalar_lea.vmem %s246, 32
      %v1603 = vld [vmem:[%s1602] ss:$2 sm:$0xff]
      %s1604 = scalar_lea.vmem %s246, 64
      %v1605 = vld [vmem:[%s1604] ss:$2 sm:$0xff]
      %s1606 = scalar_lea.vmem %s246, 96
      %v1607 = vld [vmem:[%s1606] ss:$2 sm:$0xff]
      %s1608 = scalar_lea.vmem %s246, 128
      %v1609 = vld [vmem:[%s1608] ss:$2 sm:$0xff]
      %s1610 = scalar_lea.vmem %s246, 160
      %v1611 = vld [vmem:[%s1610] ss:$2 sm:$0xff]
      %s1612 = scalar_lea.vmem %s246, 192
      %v1613 = vld [vmem:[%s1612] ss:$2 sm:$0xff]
      %s1614 = scalar_lea.vmem %s246, 224
      %v1615 = vld [vmem:[%s1614] ss:$2 sm:$0xff]
      %s1616 = scalar_lea.vmem %s246, 1
      %v1617 = vld [vmem:[%s1616] ss:$2 sm:$0xff]
      %s1618 = scalar_lea.vmem %s246, 33
      %v1619 = vld [vmem:[%s1618] ss:$2 sm:$0xff]
      %s1620 = scalar_lea.vmem %s246, 65
      %v1621 = vld [vmem:[%s1620] ss:$2 sm:$0xff]
      %s1622 = scalar_lea.vmem %s246, 97
      %v1623 = vld [vmem:[%s1622] ss:$2 sm:$0xff]
      %s1624 = scalar_lea.vmem %s246, 129
      %v1625 = vld [vmem:[%s1624] ss:$2 sm:$0xff]
      %s1626 = scalar_lea.vmem %s246, 161
      %v1627 = vld [vmem:[%s1626] ss:$2 sm:$0xff]
      %s1628 = scalar_lea.vmem %s246, 193
      %v1629 = vld [vmem:[%s1628] ss:$2 sm:$0xff]
      %s1630 = scalar_lea.vmem %s246, 225
      %v1631 = vld [vmem:[%s1630] ss:$2 sm:$0xff]
      %v1632 = vadd.f32 %v1601, %v1617
      %v1633 = vadd.f32 %v1603, %v1619
      %v1634 = vadd.f32 %v1605, %v1621
      %v1635 = vadd.f32 %v1607, %v1623
      %v1636 = vadd.f32 %v1609, %v1625
      %v1637 = vadd.f32 %v1611, %v1627
      %v1638 = vadd.f32 %v1613, %v1629
      %v1639 = vadd.f32 %v1615, %v1631
      %s1640 = scalar_lea.vmem %s246, 16
      %v1641 = vld [vmem:[%s1640] ss:$2 sm:$0xff]
      %s1642 = scalar_lea.vmem %s1640, 32
      %v1643 = vld [vmem:[%s1642] ss:$2 sm:$0xff]
      %s1644 = scalar_lea.vmem %s1640, 64
      %v1645 = vld [vmem:[%s1644] ss:$2 sm:$0xff]
      %s1646 = scalar_lea.vmem %s1640, 96
      %v1647 = vld [vmem:[%s1646] ss:$2 sm:$0xff]
      %s1648 = scalar_lea.vmem %s1640, 128
      %v1649 = vld [vmem:[%s1648] ss:$2 sm:$0xff]
      %s1650 = scalar_lea.vmem %s1640, 160
      %v1651 = vld [vmem:[%s1650] ss:$2 sm:$0xff]
      %s1652 = scalar_lea.vmem %s1640, 192
      %v1653 = vld [vmem:[%s1652] ss:$2 sm:$0xff]
      %s1654 = scalar_lea.vmem %s1640, 224
      %v1655 = vld [vmem:[%s1654] ss:$2 sm:$0xff]
      %v1656 = vadd.f32 %v1632, %v1641
      %v1657 = vadd.f32 %v1633, %v1643
      %v1658 = vadd.f32 %v1634, %v1645
      %v1659 = vadd.f32 %v1635, %v1647
      %v1660 = vadd.f32 %v1636, %v1649
      %v1661 = vadd.f32 %v1637, %v1651
      %v1662 = vadd.f32 %v1638, %v1653
      %v1663 = vadd.f32 %v1639, %v1655
      %s1664 = scalar_lea.vmem %s1640, 1
      %v1665 = vld [vmem:[%s1664] ss:$2 sm:$0xff]
      %s1666 = scalar_lea.vmem %s1640, 33
      %v1667 = vld [vmem:[%s1666] ss:$2 sm:$0xff]
      %s1668 = scalar_lea.vmem %s1640, 65
      %v1669 = vld [vmem:[%s1668] ss:$2 sm:$0xff]
      %s1670 = scalar_lea.vmem %s1640, 97
      %v1671 = vld [vmem:[%s1670] ss:$2 sm:$0xff]
      %s1672 = scalar_lea.vmem %s1640, 129
      %v1673 = vld [vmem:[%s1672] ss:$2 sm:$0xff]
      %s1674 = scalar_lea.vmem %s1640, 161
      %v1675 = vld [vmem:[%s1674] ss:$2 sm:$0xff]
      %s1676 = scalar_lea.vmem %s1640, 193
      %v1677 = vld [vmem:[%s1676] ss:$2 sm:$0xff]
      %s1678 = scalar_lea.vmem %s1640, 225
      %v1679 = vld [vmem:[%s1678] ss:$2 sm:$0xff]
      %v1680 = vadd.f32 %v1656, %v1665
      %v1681 = vadd.f32 %v1657, %v1667
      %v1682 = vadd.f32 %v1658, %v1669
      %v1683 = vadd.f32 %v1659, %v1671
      %v1684 = vadd.f32 %v1660, %v1673
      %v1685 = vadd.f32 %v1661, %v1675
      %v1686 = vadd.f32 %v1662, %v1677
      %v1687 = vadd.f32 %v1663, %v1679
      %v1688 = vld [vmem:[%s5] sm:$0xf]
      %v1690 = vsel %vm252, %v1680, 0
      %v1693 = vsel %vm252, %v1681, 0
      %v1696 = vsel %vm252, %v1682, 0
      %v1699 = vsel %vm252, %v1683, 0
      %v1702 = vsel %vm252, %v1684, 0
      %v1705 = vsel %vm252, %v1685, 0
      %v1708 = vsel %vm252, %v1686, 0
      %v1711 = vsel %vm252, %v1687, 0
      %v1714 = vsel %vm911, %v1688, 0
      %1716 = vmatprep.subr.mxu0 0.0
      %1717 = vmatpush1.msra.mxu0 %v1714
      %1718 = vmatprep.subr.mxu0 0.0
      %1719 = vmatpush1.msra.mxu0 0.0
      %1720 = vmatprep.subr.mxu0 0.0
      %1721 = vmatpush1.msra.mxu0 0.0
      %1722 = vmatprep.subr.mxu0 0.0
      %1723 = vmatpush1.msra.mxu0 0.0
      %1724 = vmatprep.subr.mxu0 0.0
      %1725 = vmatpush1.msra.mxu0 0.0
      %1726 = vmatprep.subr.mxu0 0.0
      %1727 = vmatpush1.msra.mxu0 0.0
      %1728 = vmatprep.subr.mxu0 0.0
      %1729 = vmatpush1.msra.mxu0 0.0
      %1730 = vmatprep.subr.mxu0 0.0
      %1731 = vmatpush1.msra.mxu0 0.0
      %1732 = vmatprep.subr.mxu0 0.0
      %1733 = vmatpush1.msra.mxu0 0.0
      %1734 = vmatprep.subr.mxu0 0.0
      %1735 = vmatpush1.msra.mxu0 0.0
      %1736 = vmatprep.subr.mxu0 0.0
      %1737 = vmatpush1.msra.mxu0 0.0
      %1738 = vmatprep.subr.mxu0 0.0
      %1739 = vmatpush1.msra.mxu0 0.0
      %1740 = vmatprep.subr.mxu0 0.0
      %1741 = vmatpush1.msra.mxu0 0.0
      %1742 = vmatprep.subr.mxu0 0.0
      %1743 = vmatpush1.msra.mxu0 0.0
      %1744 = vmatprep.subr.mxu0 0.0
      %1745 = vmatpush1.msra.mxu0 0.0
      %1746 = vmatprep.subr.mxu0 0.0
      %1747 = vmatpush1.msra.mxu0 0.0
      %1748 = vmatprep.subr.mxu0 0.0
      %1749 = vmatpush1.msra.mxu0 0.0
      %1750 = vmatprep.subr.mxu0 0.0
      %1751 = vmatpush1.msra.mxu0 0.0
      %1752 = vmatprep.subr.mxu0 0.0
      %1753 = vmatpush1.msra.mxu0 0.0
      %1754 = vmatprep.subr.mxu0 0.0
      %1755 = vmatpush1.msra.mxu0 0.0
      %1756 = vmatprep.subr.mxu0 0.0
      %1757 = vmatpush1.msra.mxu0 0.0
      %1758 = vmatprep.subr.mxu0 0.0
      %1759 = vmatpush1.msra.mxu0 0.0
      %1760 = vmatprep.subr.mxu0 0.0
      %1761 = vmatpush1.msra.mxu0 0.0
      %1762 = vmatprep.subr.mxu0 0.0
      %1763 = vmatpush1.msra.mxu0 0.0
      %1764 = vmatprep.subr.mxu0 0.0
      %1765 = vmatpush1.msra.mxu0 0.0
      %1766 = vmatprep.subr.mxu0 0.0
      %1767 = vmatpush1.msra.mxu0 0.0
      %1768 = vmatprep.subr.mxu0 0.0
      %1769 = vmatpush1.msra.mxu0 0.0
      %1770 = vmatprep.subr.mxu0 0.0
      %1771 = vmatpush1.msra.mxu0 0.0
      %1772 = vmatprep.subr.mxu0 0.0
      %1773 = vmatpush1.msra.mxu0 0.0
      %1774 = vmatprep.subr.mxu0 0.0
      %1775 = vmatpush1.msra.mxu0 0.0
      %1776 = vmatprep.subr.mxu0 0.0
      %1777 = vmatpush1.msra.mxu0 0.0
      %1778 = vmatprep.subr.mxu0 0.0
      %1779 = vmatpush1.msra.mxu0 0.0
      %1780 = vmatprep.mubr.f32.mxu0 0.0
      %1781 = vmatmul.mubr.f32.gmra.mrb[0].mxu0 %v1690
      %v1782 = vpop.f32.mrb[0].mxu0
      %v1783 = vadd.f32 0.0, %v1782
      %v1784 = vpop.f32.mrb[0].mxu0
      %1785 = vmatprep.mubr.f32.mxu0 0.0
      %1786 = vmatmul.mubr.f32.gmra.mrb[0].mxu0 %v1693
      %v1787 = vpop.f32.mrb[0].mxu0
      %v1788 = vadd.f32 0.0, %v1787
      %v1789 = vpop.f32.mrb[0].mxu0
      %1790 = vmatprep.mubr.f32.mxu0 0.0
      %1791 = vmatmul.mubr.f32.gmra.mrb[0].mxu0 %v1696
      %v1792 = vpop.f32.mrb[0].mxu0
      %v1793 = vadd.f32 0.0, %v1792
      %v1794 = vpop.f32.mrb[0].mxu0
      %1795 = vmatprep.mubr.f32.mxu0 0.0
      %1796 = vmatmul.mubr.f32.gmra.mrb[0].mxu0 %v1699
      %v1797 = vpop.f32.mrb[0].mxu0
      %v1798 = vadd.f32 0.0, %v1797
      %v1799 = vpop.f32.mrb[0].mxu0
      %1800 = vmatprep.mubr.f32.mxu0 0.0
      %1801 = vmatmul.mubr.f32.gmra.mrb[0].mxu0 %v1702
      %v1802 = vpop.f32.mrb[0].mxu0
      %v1803 = vadd.f32 0.0, %v1802
      %v1804 = vpop.f32.mrb[0].mxu0
      %1805 = vmatprep.mubr.f32.mxu0 0.0
      %1806 = vmatmul.mubr.f32.gmra.mrb[0].mxu0 %v1705
      %v1807 = vpop.f32.mrb[0].mxu0
      %v1808 = vadd.f32 0.0, %v1807
      %v1809 = vpop.f32.mrb[0].mxu0
      %1810 = vmatprep.mubr.f32.mxu0 0.0
      %1811 = vmatmul.mubr.f32.gmra.mrb[0].mxu0 %v1708
      %v1812 = vpop.f32.mrb[0].mxu0
      %v1813 = vadd.f32 0.0, %v1812
      %v1814 = vpop.f32.mrb[0].mxu0
      %1815 = vmatprep.mubr.f32.mxu0 0.0
      %1816 = vmatmul.mubr.f32.gmra.mrb[0].mxu0 %v1711
      %v1817 = vpop.f32.mrb[0].mxu0
      %v1818 = vadd.f32 0.0, %v1817
      %v1819 = vpop.f32.mrb[0].mxu0
      %1820 = vdwg.mxu0
      %v1821 = vadd.f32 %v1563, %v1783
      %v1822 = vadd.f32 %v1568, %v1788
      %v1823 = vadd.f32 %v1573, %v1793
      %v1824 = vadd.f32 %v1578, %v1798
      %v1825 = vadd.f32 %v1583, %v1803
      %v1826 = vadd.f32 %v1588, %v1808
      %v1827 = vadd.f32 %v1593, %v1813
      %v1828 = vadd.f32 %v1598, %v1818
      %1829 = vst.msk [vmem:[%s251] sm:$0xff] %vm811, %v1821
      %1830 = vst.msk [vmem:[%s251 + $0x8] sm:$0xff] %vm811, %v1822
      %1831 = vst.msk [vmem:[%s251 + $0x10] sm:$0xff] %vm811, %v1823
      %1832 = vst.msk [vmem:[%s251 + $0x18] sm:$0xff] %vm811, %v1824
      %1833 = vst.msk [vmem:[%s251 + $0x20] sm:$0xff] %vm811, %v1825
      %1834 = vst.msk [vmem:[%s251 + $0x28] sm:$0xff] %vm811, %v1826
      %1835 = vst.msk [vmem:[%s251 + $0x30] sm:$0xff] %vm811, %v1827
      %1836 = vst.msk [vmem:[%s251 + $0x38] sm:$0xff] %vm811, %v1828
      %p1837 = scmp.lt.s32.totalorder %s17, 1
      %s1838 = scalar_select %p1837, %s17, 1
      %s1839 = smul.addr %s1838, 8
      %s1840 = smul.addr %s1839, 8
      %s1841 = scalar_lea.vmem %s6, %s1840
      // Predicated region
      $region45: #{resnet_basic_block.1} parent=43 // pred_check
        %p1842 = pneg %p166
      $region46: #{resnet_basic_block.1} parent=43 // pred_check_branch
        %1844 = sbr.rel (%p1842) target = $region48
      $region47: #{resnet_basic_block.1} parent=43 // pred_region
        _
      $region48: #{resnet_basic_block.1} parent=43 // pred_fallthru
        _
    $region44: #{resnet_basic_block.1} parent=5 // pred_fallthru
      _
    %p1845 = scmp.le.s32.totalorder 2, %s12
    // Predicated region
    $region49: #{resnet_basic_block.1} parent=5 // pred_check
      %p1846 = pneg %p1845
    $region50: #{resnet_basic_block.1} parent=5 // pred_check_branch
      %1848 = sbr.rel (%p1846) target = $region52
    $region51: #{resnet_basic_block.1} parent=5 // pred_region
      %s1849 = ssub.s32 %s12, 2
      // Predicated region
      $region53: #{resnet_basic_block.1} parent=51 // pred_check
        %p1850 = pneg %p172
      $region54: #{resnet_basic_block.1} parent=51 // pred_check_branch
        %1852 = sbr.rel (%p1850) target = $region56
      $region55: #{resnet_basic_block.1} parent=51 // pred_region
        %p1853 = scmp.lt.s32.totalorder %s18, 1
        %s1854 = scalar_select %p1853, %s18, 1
        %s1855 = smul.addr %s1854, 8
        %s1856 = smul.addr %s1855, 8
        %s1857 = scalar_lea.vmem %s6, %s1856
      $region56: #{resnet_basic_block.1} parent=51 // pred_fallthru
        _
    $region52: #{resnet_basic_block.1} parent=5 // pred_fallthru
      _
  $region6: #{resnet_basic_block.1} parent=0 // loop_footer
    %s16 = sadd.s32 1, %s12
  $region7: #{resnet_basic_block.1} parent=0 // loop_footer_branch
    %11 = sbr.rel target = $region3
  $region8: #{resnet_basic_block.1} parent=0 // loop_exit
    _

</llo_original>
